<compile_context>
chip_gen: v6e
topology: v6e:2x2x1
jax: 0.10.0
libtpu: 0.0.40
codegen_flags: <defaults>
</compile_context>

<pallas_src>
import functools

import numpy as np

import jax
import jax.numpy as jnp
from jax import lax
from jax.experimental import pallas as pl
from jax.experimental.pallas import tpu as pltpu

KSZ = 4      # ConvTranspose3d kernel size
EPS = 1e-5   # BatchNorm eps (PyTorch default)


# ---------------------------------------------------------------------------
# Pallas kernels
# ---------------------------------------------------------------------------
def _deconv_bn_relu_kernel(p_ref, w_ref, m8_ref, cst_ref, o_ref, *, n_valid):
    # p_ref : (R, Kin)       bf16 sub-pixel patches (Kin = 8*Cin, or Cin for layer 1)
    # w_ref : (Kin, 8*Cout)  bf16 packed deconv weight
    # m8_ref: (R, 8)         f32 0/1 row/parity-group validity mask
    # cst_ref: (10 + 8*Cout, 8*Cout) f32 constants:
    #          rows 0:8   -> sel  (spread: sel[r, (r',c)] = [r == r'])
    #          row  8     -> gamma tiled over the 8 parity groups
    #          row  9     -> beta  tiled over the 8 parity groups
    #          rows 10:   -> gg   (group fold+broadcast: gg[(r,c),(r',c')] = [c == c'])
    gsz = cst_ref.shape[1]
    acc = jnp.dot(p_ref[...], w_ref[...], preferred_element_type=jnp.float32)
    # Broadcast the (R, 8) mask to (R, 8*Cout) with a tiny 0/1 matmul (no big mask DMA).
    mask = jnp.dot(m8_ref[...], cst_ref[0:8, :], preferred_element_type=jnp.float32)
    masked = acc * mask
    # Reduce over rows FIRST, then fold the 8 parity groups per channel (and
    # broadcast back) with one tiny matmul.  mask is 0/1 => masked*acc == masked^2.
    s1 = jnp.sum(masked, axis=0, keepdims=True)             # (1, 8*Cout)
    s2 = jnp.sum(masked * acc, axis=0, keepdims=True)       # (1, 8*Cout)
    gg = cst_ref[10:10 + gsz, :]
    mean = jnp.dot(s1, gg, preferred_element_type=jnp.float32) * (1.0 / n_valid)
    ex2 = jnp.dot(s2, gg, preferred_element_type=jnp.float32) * (1.0 / n_valid)
    # NOTE: E[x^2] - mean^2 is cancellation-prone in principle; fine at 2e-2 tol.
    var = ex2 - mean * mean
    scale = cst_ref[8:9, :] * lax.rsqrt(var + EPS)
    shift = cst_ref[9:10, :] - mean * scale
    o_ref[...] = jnp.maximum(acc * scale + shift, 0.0).astype(o_ref.dtype)   # ReLU


def _deconv_sigmoid_kernel(w_ref, p_ref, o_ref):
    # Transposed layout: w_ref (8*Cout, 8*Cin), p_ref (8*Cin, T) -> o_ref (8*Cout, T)
    # so the store lane axis is the large (padded) row axis: lane-dense stores.
    acc = jnp.dot(w_ref[...], p_ref[...], preferred_element_type=jnp.float32)
    # sigmoid via EUP: exp + approximate reciprocal (off the VALU slot).
    o_ref[...] = pl.reciprocal(1.0 + jnp.exp(-acc), approx=True)


# ---------------------------------------------------------------------------
# Static packing helpers (run once, outside the jitted forward)
# ---------------------------------------------------------------------------
def _subpixel_weight(w):
    # w: PyTorch ConvTranspose3d weight (Cin, Cout, 4, 4, 4) -> (8*Cin, 8*Cout).
    # Rows ordered (sd, sh, sw, cin), cols ordered (rd, rh, rw, cout); the kernel
    # tap for patch offset s and output parity r is k = 2 + r - 2*s per dimension.
    cin, cout = w.shape[0], w.shape[1]
    s_blocks = []
    for sd in (0, 1):
        for sh in (0, 1):
            for sw in (0, 1):
                taps = [w[:, :, 2 + rd - 2 * sd, 2 + rh - 2 * sh, 2 + rw - 2 * sw]
                        for rd in (0, 1) for rh in (0, 1) for rw in (0, 1)]
                s_blocks.append(jnp.stack(taps, axis=-1))   # (Cin, Cout, 8)
    wm = jnp.stack(s_blocks, axis=0)                         # (8, Cin, Cout, 8)
    wm = jnp.transpose(wm, (0, 1, 3, 2))                     # (8, Cin, 8, Cout)
    return wm.reshape(8 * cin, 8 * cout)


def _make_cst(gamma, beta, cout):
    # Packed per-layer constant operand: [sel (8); gamma8 (1); beta8 (1); gg (8C)].
    sel = np.kron(np.eye(8, dtype=np.float32), np.ones((1, cout), np.float32))
    gg = np.kron(np.ones((8, 8), np.float32), np.eye(cout, dtype=np.float32))
    g8 = jnp.tile(gamma.reshape(1, cout).astype(jnp.float32), (1, 8))
    b8 = jnp.tile(beta.reshape(1, cout).astype(jnp.float32), (1, 8))
    return jnp.concatenate([jnp.asarray(sel), g8, b8, jnp.asarray(gg)], axis=0)


def _mask8_np(b, i):
    # (B*(i+1)^3, 8) 0/1 mask: sub-pixel outputs that fall outside the final crop
    # (per dim: (m==0, r==0) or (m==I, r==1)) must not enter the BN statistics.
    m = i + 1
    v = np.ones((m, 2), np.float32)
    v[0, 0] = 0.0
    v[m - 1, 1] = 0.0
    mm = (v[:, None, None, :, None, None] *
          v[None, :, None, None, :, None] *
          v[None, None, :, None, None, :])                  # (m, m, m, 2, 2, 2)
    return np.tile(mm.reshape(m ** 3, 8), (b, 1))


# ---------------------------------------------------------------------------
# Inter-layer glue (bf16, trace-time constants only)
# ---------------------------------------------------------------------------
def _subpixel_patches(x):
    # x: (B, I, I, I, C) -> (B*(I+1)^3, 8*C).  Patch m covers input voxels
    # {m-1, m} per dim (zero padded); column order (sd, sh, sw, cin).
    b, i = x.shape[0], x.shape[1]
    m = i + 1
    xp = jnp.pad(x, ((0, 0), (1, 1), (1, 1), (1, 1), (0, 0)))
    cols = [xp[:, sd:sd + m, sh:sh + m, sw:sw + m, :]
            for sd in (0, 1) for sh in (0, 1) for sw in (0, 1)]
    p = jnp.concatenate(cols, axis=-1)                      # (B, M, M, M, 8*C)
    return p.reshape(b * m ** 3, 8 * x.shape[-1])


def _depth_to_space(y, b, i, cout):
    # y: (B*M^3, 8*cout), rows (b, md, mh, mw), cols (rd, rh, rw, co).
    # Sub-pixel output (m, r) lands at spatial position 2m + r - 1; crop to [0, 2I).
    m = i + 1
    y = y.reshape(b, m, m, m, 2, 2, 2, cout)
    y = jnp.transpose(y, (0, 1, 4, 2, 5, 3, 6, 7)).reshape(b, 2 * m, 2 * m, 2 * m, cout)
    return y[:, 1:2 * i + 1, 1:2 * i + 1, 1:2 * i + 1, :]


def _num_tensorcores():
    # v7x has 2 TensorCores per chip: split the lane-dense sigmoid layer across
    # them.  v5e/v6e have 1 TC: run it as a single block (no grid overhead).
    try:
        kind = jax.devices()[0].device_kind.lower()
        if "v7" in kind or "7x" in kind:
            return 2
    except Exception:
        pass
    return 1


# ---------------------------------------------------------------------------
# Layer wrappers around pallas_call
# ---------------------------------------------------------------------------
def _deconv_bn_relu_call(patches, wm, mask8, cst, *, n_valid):
    rows, ncol = patches.shape[0], wm.shape[1]
    kernel = functools.partial(_deconv_bn_relu_kernel, n_valid=n_valid)
    return pl.pallas_call(
        kernel,
        out_shape=jax.ShapeDtypeStruct((rows, ncol), jnp.bfloat16),
        in_specs=[pl.BlockSpec(memory_space=pltpu.MemorySpace.VMEM)] * 4,
        out_specs=pl.BlockSpec(memory_space=pltpu.MemorySpace.VMEM),
    )(patches, wm, mask8, cst)


def deconv_bn_relu(act, wm, cst):
    # act: (B, I, I, I, Cin) bf16 -> (B, 2I, 2I, 2I, Cout) bf16
    # Single VMEM-resident block: BN needs global per-channel stats and the whole
    # working set is < 100 KB, so a grid would only add per-step overhead.
    b, i = act.shape[0], act.shape[1]
    cout = wm.shape[1] // 8
    patches = _subpixel_patches(act)                         # (R, 8*Cin) bf16
    mask8 = jnp.asarray(_mask8_np(b, i))                     # (R, 8) constant
    y = _deconv_bn_relu_call(patches, wm, mask8, cst,
                             n_valid=float(b * (2 * i) ** 3))
    return _depth_to_space(y, b, i, cout)


def deconv_sigmoid(act, w_t):
    # act: (B, I, I, I, Cin) bf16 -> (B, 2I, 2I, 2I, 1) f32.  Computed transposed
    # so the store lane axis is the (padded) row axis: lane-dense stores.
    b, i = act.shape[0], act.shape[1]
    cout = w_t.shape[0] // 8
    patches = _subpixel_patches(act)                         # (R, 8*Cin) bf16
    rows, k = patches.shape
    n = w_t.shape[0]
    nc = _num_tensorcores()
    tile = -(-rows // (nc * 128)) * 128
    rows_p = tile * nc
    p_t = jnp.pad(patches, ((0, rows_p - rows), (0, 0))).T   # (8*Cin, rows_p) bf16
    if nc == 1:
        out_t = pl.pallas_call(
            _deconv_sigmoid_kernel,
            out_shape=jax.ShapeDtypeStruct((n, rows_p), jnp.float32),
            in_specs=[pl.BlockSpec(memory_space=pltpu.MemorySpace.VMEM)] * 2,
            out_specs=pl.BlockSpec(memory_space=pltpu.MemorySpace.VMEM),
        )(w_t, p_t)
    else:
        out_t = pl.pallas_call(
            _deconv_sigmoid_kernel,
            out_shape=jax.ShapeDtypeStruct((n, rows_p), jnp.float32),
            grid=(nc,),
            in_specs=[pl.BlockSpec((n, k), lambda j: (0, 0)),
                      pl.BlockSpec((k, tile), lambda j: (0, j))],
            out_specs=pl.BlockSpec((n, tile), lambda j: (0, j)),
            compiler_params=pltpu.CompilerParams(
                dimension_semantics=("parallel",)),
        )(w_t, p_t)
    return _depth_to_space(out_t.T[:rows], b, i, cout)


# ---------------------------------------------------------------------------
# Parameter init (deterministic, DCGAN-style), one-time packing, full forward
# ---------------------------------------------------------------------------
def init_params(key, noise_dim, feature_dim):
    # TODO(synk): original init_weights() was not provided; using deterministic
    # DCGAN-style init (conv ~ N(0, 0.02), BN gamma ~ N(1, 0.02), beta = 0).
    ks = jax.random.split(key, 7)
    f = feature_dim

    def convw(k, cin, cout):
        return 0.02 * jax.random.normal(k, (cin, cout, KSZ, KSZ, KSZ), jnp.float32)

    def bn(k, c):
        gamma = 1.0 + 0.02 * jax.random.normal(k, (c,), jnp.float32)
        beta = jnp.zeros((c,), jnp.float32)
        return gamma, beta

    p = {}
    p["w1"] = convw(ks[0], noise_dim, 4 * f); p["g1"], p["b1"] = bn(ks[1], 4 * f)
    p["w2"] = convw(ks[2], 4 * f, 2 * f);     p["g2"], p["b2"] = bn(ks[3], 2 * f)
    p["w3"] = convw(ks[4], 2 * f, f);         p["g3"], p["b3"] = bn(ks[5], f)
    p["w4"] = convw(ks[6], f, 1)
    return p


def prepare_params(p):
    # One-time packing (outside jit): sub-pixel weight layout + fused constants.
    # Re-run if gamma/beta change (e.g. per training step).
    noise_dim, c1 = p["w1"].shape[0], p["w1"].shape[1]
    c2, c3 = p["w2"].shape[1], p["w3"].shape[1]
    # Layer 1 (1x1x1 input): only the central 2x2x2 kernel taps reach the output.
    w1d = jnp.transpose(p["w1"][:, :, 1:3, 1:3, 1:3], (0, 2, 3, 4, 1))
    w1d = w1d.reshape(noise_dim, 8 * c1)
    return {
        "w1": w1d.astype(jnp.bfloat16),
        "cst1": _make_cst(p["g1"], p["b1"], c1),
        "w2": _subpixel_weight(p["w2"]).astype(jnp.bfloat16),
        "cst2": _make_cst(p["g2"], p["b2"], c2),
        "w3": _subpixel_weight(p["w3"]).astype(jnp.bfloat16),
        "cst3": _make_cst(p["g3"], p["b3"], c3),
        "w4t": _subpixel_weight(p["w4"]).T.astype(jnp.bfloat16),
    }


def conv_generator_forward(prep, x):
    # x: (B, noise_dim) noise -> (B, 16, 16, 16) in [0, 1]
    # TODO(synk): BatchNorm running statistics (eval mode) are not tracked; this
    # reproduces training-mode (batch-statistics) normalization only.
    b = x.shape[0]
    c1 = prep["w1"].shape[1] // 8
    # Layer 1: direct dense matmul (no patches / mask / depth-to-space needed).
    m8_1 = jnp.ones((b, 8), jnp.float32)
    y1 = _deconv_bn_relu_call(x.astype(jnp.bfloat16), prep["w1"], m8_1, prep["cst1"],
                              n_valid=float(b * 8))
    act = y1.reshape(b, 2, 2, 2, c1)                                  # (B,2,2,2,4f)
    # Layers 2-3: sub-pixel deconv + BN + ReLU (bf16 activations between layers).
    act = deconv_bn_relu(act, prep["w2"], prep["cst2"])               # (B,4,4,4,2f)
    act = deconv_bn_relu(act, prep["w3"], prep["cst3"])               # (B,8,8,8, f)
    # Layer 4: sub-pixel deconv + sigmoid, transposed/lane-dense output.
    out = deconv_sigmoid(act, prep["w4t"])                            # (B,16,16,16,1)
    return jnp.squeeze(out)  # torch.squeeze


# ---------------------------------------------------------------------------
# Pure-JAX reference (XLA conv path) for a sanity check
# ---------------------------------------------------------------------------
def _ref_conv_transpose(x_ncdhw, w):
    rhs = jnp.transpose(jnp.flip(w, axis=(2, 3, 4)), (1, 0, 2, 3, 4))  # (Cout,Cin,4,4,4)
    return lax.conv_general_dilated(
        x_ncdhw, rhs, window_strides=(1, 1, 1), padding=[(2, 2)] * 3,
        lhs_dilation=(2, 2, 2),
        dimension_numbers=("NCDHW", "OIDHW", "NCDHW"),
        precision=lax.Precision.HIGHEST)


def _ref_forward(params, x, noise_dim):
    b = x.shape[0]
    out = x.reshape(b, noise_dim, 1, 1, 1)
    for w, g, bb in [(params["w1"], params["g1"], params["b1"]),
                     (params["w2"], params["g2"], params["b2"]),
                     (params["w3"], params["g3"], params["b3"])]:
        out = _ref_conv_transpose(out, w)
        mean = jnp.mean(out, axis=(0, 2, 3, 4), keepdims=True)
        var = jnp.mean((out - mean) ** 2, axis=(0, 2, 3, 4), keepdims=True)
        out = (out - mean) * lax.rsqrt(var + EPS)
        out = out * g.reshape(1, -1, 1, 1, 1) + bb.reshape(1, -1, 1, 1, 1)
        out = jnp.maximum(out, 0.0)
    out = _ref_conv_transpose(out, params["w4"])
    out = jax.nn.sigmoid(out)
    return jnp.squeeze(out)


if __name__ == "__main__":
    noise_dim, feature_dim, batch = 16, 4, 2
    key = jax.random.PRNGKey(0)
    kp, kx = jax.random.split(key)
    params = init_params(kp, noise_dim, feature_dim)
    x = jax.random.normal(kx, (batch, noise_dim), jnp.float32)

    prep = prepare_params(params)   # one-time static packing, outside jit
    fwd = jax.jit(conv_generator_forward)
    out = jax.block_until_ready(fwd(prep, x))

    assert out.shape == (batch, 16, 16, 16), out.shape
    ref = _ref_forward(params, x, noise_dim)
    err = float(jnp.max(jnp.abs(out - ref)))
    assert jnp.allclose(out, ref, atol=2e-2, rtol=2e-2), err
    print("KERNEL_OK")
</pallas_src>

<mosaic_0001>
module attributes {stable_mosaic.version = 11 : i64} {
  func.func @_deconv_bn_relu_kernel(%arg0: memref<2x16xbf16, #tpu.memory_space<vmem>>, %arg1: memref<16x128xbf16, #tpu.memory_space<vmem>>, %arg2: memref<2x8xf32, #tpu.memory_space<vmem>>, %arg3: memref<138x128xf32, #tpu.memory_space<vmem>>, %arg4: memref<2x128xbf16, #tpu.memory_space<vmem>>) attributes {dimension_semantics = [], scalar_prefetch = 0 : i64, scratch_operands = 0 : i64, tpu.core_type = #tpu.core_type<tc>} {
    %c0 = arith.constant 0 : index
    %c0_0 = arith.constant 0 : index
    %0 = vector.load %arg0[%c0, %c0_0] : memref<2x16xbf16, #tpu.memory_space<vmem>>, vector<2x16xbf16>
    %c0_1 = arith.constant 0 : index
    %c0_2 = arith.constant 0 : index
    %1 = vector.load %arg1[%c0_1, %c0_2] : memref<16x128xbf16, #tpu.memory_space<vmem>>, vector<16x128xbf16>
    %cst = arith.constant dense<0.000000e+00> : vector<2x128xf32>
    %2 = tpu.matmul %0, %1, %cst {dimension_numbers = #tpu.dot_dimension_numbers<[1], [0], [0], [1], [0, 0, 1, 1], [], []>} : vector<2x16xbf16>, vector<16x128xbf16>, vector<2x128xf32> -> vector<2x128xf32>
    %c0_3 = arith.constant 0 : index
    %c0_4 = arith.constant 0 : index
    %3 = vector.load %arg2[%c0_3, %c0_4] : memref<2x8xf32, #tpu.memory_space<vmem>>, vector<2x8xf32>
    %c0_5 = arith.constant 0 : index
    %c0_6 = arith.constant 0 : index
    %4 = vector.load %arg3[%c0_5, %c0_6] : memref<138x128xf32, #tpu.memory_space<vmem>>, vector<8x128xf32>
    %cst_7 = arith.constant dense<0.000000e+00> : vector<2x128xf32>
    %5 = tpu.matmul %3, %4, %cst_7 {dimension_numbers = #tpu.dot_dimension_numbers<[1], [0], [0], [1], [0, 0, 1, 1], [], []>} : vector<2x8xf32>, vector<8x128xf32>, vector<2x128xf32> -> vector<2x128xf32>
    %6 = arith.mulf %2, %5 : vector<2x128xf32>
    %cst_8 = arith.constant dense<0.000000e+00> : vector<128xf32>
    %7 = vector.multi_reduction <add>, %6, %cst_8 [0] : vector<2x128xf32> to vector<128xf32>
    %8 = vector.shape_cast %7 : vector<128xf32> to vector<1x128xf32>
    %9 = arith.mulf %6, %2 : vector<2x128xf32>
    %cst_9 = arith.constant dense<0.000000e+00> : vector<128xf32>
    %10 = vector.multi_reduction <add>, %9, %cst_9 [0] : vector<2x128xf32> to vector<128xf32>
    %11 = vector.shape_cast %10 : vector<128xf32> to vector<1x128xf32>
    %c10 = arith.constant 10 : index
    %c0_10 = arith.constant 0 : index
    %12 = vector.load %arg3[%c10, %c0_10] : memref<138x128xf32, #tpu.memory_space<vmem>>, vector<128x128xf32>
    %cst_11 = arith.constant dense<0.000000e+00> : vector<1x128xf32>
    %13 = tpu.matmul %8, %12, %cst_11 {dimension_numbers = #tpu.dot_dimension_numbers<[1], [0], [0], [1], [0, 0, 1, 1], [], []>} : vector<1x128xf32>, vector<128x128xf32>, vector<1x128xf32> -> vector<1x128xf32>
    %cst_12 = arith.constant 6.250000e-02 : f32
    %14 = vector.broadcast %cst_12 : f32 to vector<1x128xf32>
    %15 = arith.mulf %13, %14 : vector<1x128xf32>
    %cst_13 = arith.constant dense<0.000000e+00> : vector<1x128xf32>
    %16 = tpu.matmul %11, %12, %cst_13 {dimension_numbers = #tpu.dot_dimension_numbers<[1], [0], [0], [1], [0, 0, 1, 1], [], []>} : vector<1x128xf32>, vector<128x128xf32>, vector<1x128xf32> -> vector<1x128xf32>
    %cst_14 = arith.constant 6.250000e-02 : f32
    %17 = vector.broadcast %cst_14 : f32 to vector<1x128xf32>
    %18 = arith.mulf %16, %17 : vector<1x128xf32>
    %19 = arith.mulf %15, %15 : vector<1x128xf32>
    %20 = arith.subf %18, %19 : vector<1x128xf32>
    %c8 = arith.constant 8 : index
    %c0_15 = arith.constant 0 : index
    %21 = vector.load %arg3[%c8, %c0_15] : memref<138x128xf32, #tpu.memory_space<vmem>>, vector<1x128xf32>
    %cst_16 = arith.constant 9.99999974E-6 : f32
    %22 = vector.broadcast %cst_16 : f32 to vector<1x128xf32>
    %23 = arith.addf %20, %22 : vector<1x128xf32>
    %24 = math.rsqrt %23 : vector<1x128xf32>
    %25 = arith.mulf %21, %24 : vector<1x128xf32>
    %c9 = arith.constant 9 : index
    %c0_17 = arith.constant 0 : index
    %26 = vector.load %arg3[%c9, %c0_17] : memref<138x128xf32, #tpu.memory_space<vmem>>, vector<1x128xf32>
    %27 = arith.mulf %15, %25 : vector<1x128xf32>
    %28 = arith.subf %26, %27 : vector<1x128xf32>
    %29 = vector.broadcast %25 : vector<1x128xf32> to vector<2x128xf32>
    %30 = arith.mulf %2, %29 : vector<2x128xf32>
    %31 = vector.broadcast %28 : vector<1x128xf32> to vector<2x128xf32>
    %32 = arith.addf %30, %31 : vector<2x128xf32>
    %cst_18 = arith.constant 0.000000e+00 : f32
    %33 = vector.broadcast %cst_18 : f32 to vector<2x128xf32>
    %34 = arith.maximumf %32, %33 : vector<2x128xf32>
    %35 = arith.truncf %34 : vector<2x128xf32> to vector<2x128xbf16>
    %c0_19 = arith.constant 0 : index
    %c0_20 = arith.constant 0 : index
    %36 = vector.load %arg4[%c0_19, %c0_20] : memref<2x128xbf16, #tpu.memory_space<vmem>>, vector<2x128xbf16>
    tpu.vector_store %arg4[%c0_19, %c0_20], %35 {strides = array<i32>} : memref<2x128xbf16, #tpu.memory_space<vmem>>, vector<2x128xbf16>,
    return
  }
}

module attributes {stable_mosaic.version = 11 : i64} {
  func.func @_deconv_bn_relu_kernel(%arg0: memref<54x128xbf16, #tpu.memory_space<vmem>>, %arg1: memref<128x64xbf16, #tpu.memory_space<vmem>>, %arg2: memref<54x8xf32, #tpu.memory_space<vmem>>, %arg3: memref<74x64xf32, #tpu.memory_space<vmem>>, %arg4: memref<54x64xbf16, #tpu.memory_space<vmem>>) attributes {dimension_semantics = [], scalar_prefetch = 0 : i64, scratch_operands = 0 : i64, tpu.core_type = #tpu.core_type<tc>} {
    %c0 = arith.constant 0 : index
    %c0_0 = arith.constant 0 : index
    %0 = vector.load %arg0[%c0, %c0_0] : memref<54x128xbf16, #tpu.memory_space<vmem>>, vector<54x128xbf16>
    %c0_1 = arith.constant 0 : index
    %c0_2 = arith.constant 0 : index
    %1 = vector.load %arg1[%c0_1, %c0_2] : memref<128x64xbf16, #tpu.memory_space<vmem>>, vector<128x64xbf16>
    %cst = arith.constant dense<0.000000e+00> : vector<54x64xf32>
    %2 = tpu.matmul %0, %1, %cst {dimension_numbers = #tpu.dot_dimension_numbers<[1], [0], [0], [1], [0, 0, 1, 1], [], []>} : vector<54x128xbf16>, vector<128x64xbf16>, vector<54x64xf32> -> vector<54x64xf32>
    %c0_3 = arith.constant 0 : index
    %c0_4 = arith.constant 0 : index
    %3 = vector.load %arg2[%c0_3, %c0_4] : memref<54x8xf32, #tpu.memory_space<vmem>>, vector<54x8xf32>
    %c0_5 = arith.constant 0 : index
    %c0_6 = arith.constant 0 : index
    %4 = vector.load %arg3[%c0_5, %c0_6] : memref<74x64xf32, #tpu.memory_space<vmem>>, vector<8x64xf32>
    %cst_7 = arith.constant dense<0.000000e+00> : vector<54x64xf32>
    %5 = tpu.matmul %3, %4, %cst_7 {dimension_numbers = #tpu.dot_dimension_numbers<[1], [0], [0], [1], [0, 0, 1, 1], [], []>} : vector<54x8xf32>, vector<8x64xf32>, vector<54x64xf32> -> vector<54x64xf32>
    %6 = arith.mulf %2, %5 : vector<54x64xf32>
    %cst_8 = arith.constant dense<0.000000e+00> : vector<64xf32>
    %7 = vector.multi_reduction <add>, %6, %cst_8 [0] : vector<54x64xf32> to vector<64xf32>
    %8 = vector.shape_cast %7 : vector<64xf32> to vector<1x64xf32>
    %9 = arith.mulf %6, %2 : vector<54x64xf32>
    %cst_9 = arith.constant dense<0.000000e+00> : vector<64xf32>
    %10 = vector.multi_reduction <add>, %9, %cst_9 [0] : vector<54x64xf32> to vector<64xf32>
    %11 = vector.shape_cast %10 : vector<64xf32> to vector<1x64xf32>
    %c10 = arith.constant 10 : index
    %c0_10 = arith.constant 0 : index
    %12 = vector.load %arg3[%c10, %c0_10] : memref<74x64xf32, #tpu.memory_space<vmem>>, vector<64x64xf32>
    %cst_11 = arith.constant dense<0.000000e+00> : vector<1x64xf32>
    %13 = tpu.matmul %8, %12, %cst_11 {dimension_numbers = #tpu.dot_dimension_numbers<[1], [0], [0], [1], [0, 0, 1, 1], [], []>} : vector<1x64xf32>, vector<64x64xf32>, vector<1x64xf32> -> vector<1x64xf32>
    %cst_12 = arith.constant 7.812500e-03 : f32
    %14 = vector.broadcast %cst_12 : f32 to vector<1x64xf32>
    %15 = arith.mulf %13, %14 : vector<1x64xf32>
    %cst_13 = arith.constant dense<0.000000e+00> : vector<1x64xf32>
    %16 = tpu.matmul %11, %12, %cst_13 {dimension_numbers = #tpu.dot_dimension_numbers<[1], [0], [0], [1], [0, 0, 1, 1], [], []>} : vector<1x64xf32>, vector<64x64xf32>, vector<1x64xf32> -> vector<1x64xf32>
    %cst_14 = arith.constant 7.812500e-03 : f32
    %17 = vector.broadcast %cst_14 : f32 to vector<1x64xf32>
    %18 = arith.mulf %16, %17 : vector<1x64xf32>
    %19 = arith.mulf %15, %15 : vector<1x64xf32>
    %20 = arith.subf %18, %19 : vector<1x64xf32>
    %c8 = arith.constant 8 : index
    %c0_15 = arith.constant 0 : index
    %21 = vector.load %arg3[%c8, %c0_15] : memref<74x64xf32, #tpu.memory_space<vmem>>, vector<1x64xf32>
    %cst_16 = arith.constant 9.99999974E-6 : f32
    %22 = vector.broadcast %cst_16 : f32 to vector<1x64xf32>
    %23 = arith.addf %20, %22 : vector<1x64xf32>
    %24 = math.rsqrt %23 : vector<1x64xf32>
    %25 = arith.mulf %21, %24 : vector<1x64xf32>
    %c9 = arith.constant 9 : index
    %c0_17 = arith.constant 0 : index
    %26 = vector.load %arg3[%c9, %c0_17] : memref<74x64xf32, #tpu.memory_space<vmem>>, vector<1x64xf32>
    %27 = arith.mulf %15, %25 : vector<1x64xf32>
    %28 = arith.subf %26, %27 : vector<1x64xf32>
    %29 = vector.broadcast %25 : vector<1x64xf32> to vector<54x64xf32>
    %30 = arith.mulf %2, %29 : vector<54x64xf32>
    %31 = vector.broadcast %28 : vector<1x64xf32> to vector<54x64xf32>
    %32 = arith.addf %30, %31 : vector<54x64xf32>
    %cst_18 = arith.constant 0.000000e+00 : f32
    %33 = vector.broadcast %cst_18 : f32 to vector<54x64xf32>
    %34 = arith.maximumf %32, %33 : vector<54x64xf32>
    %35 = arith.truncf %34 : vector<54x64xf32> to vector<54x64xbf16>
    %c0_19 = arith.constant 0 : index
    %c0_20 = arith.constant 0 : index
    %36 = vector.load %arg4[%c0_19, %c0_20] : memref<54x64xbf16, #tpu.memory_space<vmem>>, vector<54x64xbf16>
    tpu.vector_store %arg4[%c0_19, %c0_20], %35 {strides = array<i32>} : memref<54x64xbf16, #tpu.memory_space<vmem>>, vector<54x64xbf16>,
    return
  }
}

module attributes {stable_mosaic.version = 11 : i64} {
  func.func @_deconv_bn_relu_kernel(%arg0: memref<250x64xbf16, #tpu.memory_space<vmem>>, %arg1: memref<64x32xbf16, #tpu.memory_space<vmem>>, %arg2: memref<250x8xf32, #tpu.memory_space<vmem>>, %arg3: memref<42x32xf32, #tpu.memory_space<vmem>>, %arg4: memref<250x32xbf16, #tpu.memory_space<vmem>>) attributes {dimension_semantics = [], scalar_prefetch = 0 : i64, scratch_operands = 0 : i64, tpu.core_type = #tpu.core_type<tc>} {
    %c0 = arith.constant 0 : index
    %c0_0 = arith.constant 0 : index
    %0 = vector.load %arg0[%c0, %c0_0] : memref<250x64xbf16, #tpu.memory_space<vmem>>, vector<250x64xbf16>
    %c0_1 = arith.constant 0 : index
    %c0_2 = arith.constant 0 : index
    %1 = vector.load %arg1[%c0_1, %c0_2] : memref<64x32xbf16, #tpu.memory_space<vmem>>, vector<64x32xbf16>
    %cst = arith.constant dense<0.000000e+00> : vector<250x32xf32>
    %2 = tpu.matmul %0, %1, %cst {dimension_numbers = #tpu.dot_dimension_numbers<[1], [0], [0], [1], [0, 0, 1, 1], [], []>} : vector<250x64xbf16>, vector<64x32xbf16>, vector<250x32xf32> -> vector<250x32xf32>
    %c0_3 = arith.constant 0 : index
    %c0_4 = arith.constant 0 : index
    %3 = vector.load %arg2[%c0_3, %c0_4] : memref<250x8xf32, #tpu.memory_space<vmem>>, vector<250x8xf32>
    %c0_5 = arith.constant 0 : index
    %c0_6 = arith.constant 0 : index
    %4 = vector.load %arg3[%c0_5, %c0_6] : memref<42x32xf32, #tpu.memory_space<vmem>>, vector<8x32xf32>
    %cst_7 = arith.constant dense<0.000000e+00> : vector<250x32xf32>
    %5 = tpu.matmul %3, %4, %cst_7 {dimension_numbers = #tpu.dot_dimension_numbers<[1], [0], [0], [1], [0, 0, 1, 1], [], []>} : vector<250x8xf32>, vector<8x32xf32>, vector<250x32xf32> -> vector<250x32xf32>
    %6 = arith.mulf %2, %5 : vector<250x32xf32>
    %cst_8 = arith.constant dense<0.000000e+00> : vector<32xf32>
    %7 = vector.multi_reduction <add>, %6, %cst_8 [0] : vector<250x32xf32> to vector<32xf32>
    %8 = vector.shape_cast %7 : vector<32xf32> to vector<1x32xf32>
    %9 = arith.mulf %6, %2 : vector<250x32xf32>
    %cst_9 = arith.constant dense<0.000000e+00> : vector<32xf32>
    %10 = vector.multi_reduction <add>, %9, %cst_9 [0] : vector<250x32xf32> to vector<32xf32>
    %11 = vector.shape_cast %10 : vector<32xf32> to vector<1x32xf32>
    %c10 = arith.constant 10 : index
    %c0_10 = arith.constant 0 : index
    %12 = vector.load %arg3[%c10, %c0_10] : memref<42x32xf32, #tpu.memory_space<vmem>>, vector<32x32xf32>
    %cst_11 = arith.constant dense<0.000000e+00> : vector<1x32xf32>
    %13 = tpu.matmul %8, %12, %cst_11 {dimension_numbers = #tpu.dot_dimension_numbers<[1], [0], [0], [1], [0, 0, 1, 1], [], []>} : vector<1x32xf32>, vector<32x32xf32>, vector<1x32xf32> -> vector<1x32xf32>
    %cst_12 = arith.constant 9.765625E-4 : f32
    %14 = vector.broadcast %cst_12 : f32 to vector<1x32xf32>
    %15 = arith.mulf %13, %14 : vector<1x32xf32>
    %cst_13 = arith.constant dense<0.000000e+00> : vector<1x32xf32>
    %16 = tpu.matmul %11, %12, %cst_13 {dimension_numbers = #tpu.dot_dimension_numbers<[1], [0], [0], [1], [0, 0, 1, 1], [], []>} : vector<1x32xf32>, vector<32x32xf32>, vector<1x32xf32> -> vector<1x32xf32>
    %cst_14 = arith.constant 9.765625E-4 : f32
    %17 = vector.broadcast %cst_14 : f32 to vector<1x32xf32>
    %18 = arith.mulf %16, %17 : vector<1x32xf32>
    %19 = arith.mulf %15, %15 : vector<1x32xf32>
    %20 = arith.subf %18, %19 : vector<1x32xf32>
    %c8 = arith.constant 8 : index
    %c0_15 = arith.constant 0 : index
    %21 = vector.load %arg3[%c8, %c0_15] : memref<42x32xf32, #tpu.memory_space<vmem>>, vector<1x32xf32>
    %cst_16 = arith.constant 9.99999974E-6 : f32
    %22 = vector.broadcast %cst_16 : f32 to vector<1x32xf32>
    %23 = arith.addf %20, %22 : vector<1x32xf32>
    %24 = math.rsqrt %23 : vector<1x32xf32>
    %25 = arith.mulf %21, %24 : vector<1x32xf32>
    %c9 = arith.constant 9 : index
    %c0_17 = arith.constant 0 : index
    %26 = vector.load %arg3[%c9, %c0_17] : memref<42x32xf32, #tpu.memory_space<vmem>>, vector<1x32xf32>
    %27 = arith.mulf %15, %25 : vector<1x32xf32>
    %28 = arith.subf %26, %27 : vector<1x32xf32>
    %29 = vector.broadcast %25 : vector<1x32xf32> to vector<250x32xf32>
    %30 = arith.mulf %2, %29 : vector<250x32xf32>
    %31 = vector.broadcast %28 : vector<1x32xf32> to vector<250x32xf32>
    %32 = arith.addf %30, %31 : vector<250x32xf32>
    %cst_18 = arith.constant 0.000000e+00 : f32
    %33 = vector.broadcast %cst_18 : f32 to vector<250x32xf32>
    %34 = arith.maximumf %32, %33 : vector<250x32xf32>
    %35 = arith.truncf %34 : vector<250x32xf32> to vector<250x32xbf16>
    %c0_19 = arith.constant 0 : index
    %c0_20 = arith.constant 0 : index
    %36 = vector.load %arg4[%c0_19, %c0_20] : memref<250x32xbf16, #tpu.memory_space<vmem>>, vector<250x32xbf16>
    tpu.vector_store %arg4[%c0_19, %c0_20], %35 {strides = array<i32>} : memref<250x32xbf16, #tpu.memory_space<vmem>>, vector<250x32xbf16>,
    return
  }
}

module attributes {stable_mosaic.version = 11 : i64} {
  func.func @_deconv_sigmoid_kernel(%arg0: memref<8x32xbf16, #tpu.memory_space<vmem>>, %arg1: memref<32x1536xbf16, #tpu.memory_space<vmem>>, %arg2: memref<8x1536xf32, #tpu.memory_space<vmem>>) attributes {dimension_semantics = [], scalar_prefetch = 0 : i64, scratch_operands = 0 : i64, tpu.core_type = #tpu.core_type<tc>} {
    %c0 = arith.constant 0 : index
    %c0_0 = arith.constant 0 : index
    %0 = vector.load %arg0[%c0, %c0_0] : memref<8x32xbf16, #tpu.memory_space<vmem>>, vector<8x32xbf16>
    %c0_1 = arith.constant 0 : index
    %c0_2 = arith.constant 0 : index
    %1 = vector.load %arg1[%c0_1, %c0_2] : memref<32x1536xbf16, #tpu.memory_space<vmem>>, vector<32x1536xbf16>
    %cst = arith.constant dense<0.000000e+00> : vector<8x1536xf32>
    %2 = tpu.matmul %0, %1, %cst {dimension_numbers = #tpu.dot_dimension_numbers<[1], [0], [0], [1], [0, 0, 1, 1], [], []>} : vector<8x32xbf16>, vector<32x1536xbf16>, vector<8x1536xf32> -> vector<8x1536xf32>
    %cst_3 = arith.constant 0.000000e+00 : f32
    %3 = vector.broadcast %cst_3 : f32 to vector<8x1536xf32>
    %4 = arith.subf %3, %2 : vector<8x1536xf32>
    %5 = math.exp %4 : vector<8x1536xf32>
    %cst_4 = arith.constant 1.000000e+00 : f32
    %6 = vector.broadcast %cst_4 : f32 to vector<8x1536xf32>
    %7 = arith.addf %6, %5 : vector<8x1536xf32>
    %8 = tpu.reciprocal %7 {approx = true} : vector<8x1536xf32> -> vector<8x1536xf32>
    %c0_5 = arith.constant 0 : index
    %c0_6 = arith.constant 0 : index
    %9 = vector.load %arg2[%c0_5, %c0_6] : memref<8x1536xf32, #tpu.memory_space<vmem>>, vector<8x1536xf32>
    tpu.vector_store %arg2[%c0_5, %c0_6], %8 {strides = array<i32>} : memref<8x1536xf32, #tpu.memory_space<vmem>>, vector<8x1536xf32>,
    return
  }
}

</mosaic_0001>

<llo_original>
// kernel: conv_generator_forward.4
$region0: #{conv_generator_forward.4}
  #allocation0 [shape = 'u32[]', space=smem, size = 0x4, offset = 0x4, fixed_abs, tag = 'smem constant byte address 0x4 - core index']
  #allocation1 [shape = 'u32[144,128]{1,0:T(1,128)}', space=vmem, size = 0x12000, scoped, tag = 'internal scratch']
  %s0 = inlined_call_operand.vmem [shape: bf16[2,16], index: 0, kind: input, shape index: {}]
  %s1 = inlined_call_operand.hbm [shape: bf16[16,128], index: 1, kind: input, shape index: {}]
  %s2 = inlined_call_operand.vmem [shape: f32[2,8], index: 2, kind: input, shape index: {}]
  %s3 = inlined_call_operand.hbm [shape: f32[138,128], index: 3, kind: input, shape index: {}]
  %s4 = inlined_call_operand.vmem [shape: bf16[2,128], index: 4, kind: output, shape index: {}]
  %s5 = sld [smem:[#allocation0]]
  $region34: #{conv_generator_forward.4} parent=0
    _
  %s7 = ssub.s32 1, %s5
  %s8 = scalar_select 0, %s7, %s5
  $region1: #{conv_generator_forward.4} parent=0
    #allocation2 [shape = 'u8[4096]{0}', space=vmem, size = 0x1000, scoped, tag = 'input window, operand 1, single buffered']
    #allocation3 [shape = 's32[1]{0}', space=sflag, size = 0x4, scoped, tag = 'scoped memory for conv_generator_forward.4']
    #allocation4 [shape = 'u8[73728]{0}', space=vmem, size = 0x12000, scoped, tag = 'input window, operand 3, single buffered']
    #allocation5 [shape = 's32[1]{0}', space=sflag, size = 0x4, scoped, tag = 'scoped memory for conv_generator_forward.4']
    %9 = vsyncpa [#allocation3], 0
    %10 = vsyncpa [#allocation5], 0
    // Predicated region
    $region2: #{conv_generator_forward.4} parent=1 // pred_check
      _
    $region3: #{conv_generator_forward.4} parent=1 // pred_check_branch
      %12 = sbr.rel (0) target = $region5
    $region4: #{conv_generator_forward.4} parent=1 // pred_region
      _
    $region5: #{conv_generator_forward.4} parent=1 // pred_fallthru
      _
    // Predicated region
    $region6: #{conv_generator_forward.4} parent=1 // pred_check
      _
    $region7: #{conv_generator_forward.4} parent=1 // pred_check_branch
      %14 = sbr.rel (0) target = $region9
    $region8: #{conv_generator_forward.4} parent=1 // pred_region
      %s16 = ssub.s32 128, 128
      %17 = vsyncadd [#allocation3], %s16
      %s18 = sshll.u32 [#allocation2], 4
      %s19 = int_to_ptr.vmem [resolvable:$true] %s18
      %24 = dma.hbm_to_vmem [thread:$0]  %s1, 128, %s19, [#allocation3], 64, 64, 4
    $region9: #{conv_generator_forward.4} parent=1 // pred_fallthru
      _
    // Predicated region
    $region10: #{conv_generator_forward.4} parent=1 // pred_check
      _
    $region11: #{conv_generator_forward.4} parent=1 // pred_check_branch
      %26 = sbr.rel (0) target = $region13
    $region12: #{conv_generator_forward.4} parent=1 // pred_region
      _
    $region13: #{conv_generator_forward.4} parent=1 // pred_fallthru
      _
    // Predicated region
    $region14: #{conv_generator_forward.4} parent=1 // pred_check
      _
    $region15: #{conv_generator_forward.4} parent=1 // pred_check_branch
      %28 = sbr.rel (0) target = $region17
    $region16: #{conv_generator_forward.4} parent=1 // pred_region
      %s30 = ssub.s32 2304, 2304
      %31 = vsyncadd [#allocation5], %s30
      %s32 = sshll.u32 [#allocation4], 4
      %s33 = int_to_ptr.vmem [resolvable:$true] %s32
      %38 = dma.hbm_to_vmem [thread:$0]  %s3, 2304, %s33, [#allocation5], 128, 128, 8
    $region17: #{conv_generator_forward.4} parent=1 // pred_fallthru
      _
    // Predicated region
    $region18: #{conv_generator_forward.4} parent=1 // pred_check
      _
    $region19: #{conv_generator_forward.4} parent=1 // pred_check_branch
      %40 = sbr.rel (0) target = $region21
    $region20: #{conv_generator_forward.4} parent=1 // pred_region
      %41 = dma.done [#allocation3], 128
    $region21: #{conv_generator_forward.4} parent=1 // pred_fallthru
      _
    // Predicated region
    $region22: #{conv_generator_forward.4} parent=1 // pred_check
      _
    $region23: #{conv_generator_forward.4} parent=1 // pred_check_branch
      %43 = sbr.rel (0) target = $region25
    $region24: #{conv_generator_forward.4} parent=1 // pred_region
      %44 = dma.done [#allocation5], 2304
    $region25: #{conv_generator_forward.4} parent=1 // pred_fallthru
      _
    %v46 = vld [vmem:[%s0] sm:$0x1]
    %v47 = vld [vmem:[#allocation2] sm:$0xf]
    %v48 = vld [vmem:[#allocation2 + $0x4] sm:$0xf]
    %v51 = vunpack.c.l.b16 %v47
    %v52 = vunpack.c.l.b16 %v48
    %v53 = vpack.c.b16 %v52, %v51
    %vm55 = vcmask 130048
    %v57 = vsel %vm55, %v46, 0
    %59 = vmatprep.subr.bf16.mxu0 0
    %60 = vmatpush1.bf16.msra.mxu0 0
    %61 = vmatprep.subr.bf16.mxu0 0
    %62 = vmatpush1.bf16.msra.mxu0 0
    %63 = vmatprep.subr.bf16.mxu0 0
    %64 = vmatpush1.bf16.msra.mxu0 0
    %65 = vmatprep.subr.bf16.mxu0 0
    %66 = vmatpush1.bf16.msra.mxu0 0
    %67 = vmatprep.subr.bf16.mxu0 0
    %68 = vmatpush1.bf16.msra.mxu0 0
    %69 = vmatprep.subr.bf16.mxu0 0
    %70 = vmatpush1.bf16.msra.mxu0 0
    %71 = vmatprep.subr.bf16.mxu0 0
    %72 = vmatpush1.bf16.msra.mxu0 0
    %73 = vmatprep.subr.bf16.mxu0 0
    %74 = vmatpush1.bf16.msra.mxu0 %v53
    %75 = vmatprep.subr.bf16.mxu0 0
    %76 = vmatpush2.bf16.msra.mxu0 0
    %77 = vmatprep.subr.bf16.mxu0 0
    %78 = vmatpush2.bf16.msra.mxu0 0
    %79 = vmatprep.subr.bf16.mxu0 0
    %80 = vmatpush2.bf16.msra.mxu0 0
    %81 = vmatprep.subr.bf16.mxu0 0
    %82 = vmatpush2.bf16.msra.mxu0 0
    %83 = vmatprep.subr.bf16.mxu0 0
    %84 = vmatpush2.bf16.msra.mxu0 0
    %85 = vmatprep.subr.bf16.mxu0 0
    %86 = vmatpush2.bf16.msra.mxu0 0
    %87 = vmatprep.subr.bf16.mxu0 0
    %88 = vmatpush2.bf16.msra.mxu0 0
    %89 = vmatprep.subr.bf16.mxu0 0
    %90 = vmatpush2.bf16.msra.mxu0 0
    %91 = vmatprep.mubr.bf16.mxu0 0
    %92 = vmatmul.mubr.bf16.gmra.mxu0 %v57
    %v93 = vpop.f32.mrf.mxu0
    %v94 = vadd.f32 0.0, %v93
    %v95 = vpop.f32.mrf.mxu0
    %v96 = vpop.f32.mrf.mxu0
    %v97 = vpop.f32.mrf.mxu0
    %98 = vdwg.mxu0
    %v99 = vld [vmem:[%s2] sm:$0x3]
    %v100 = vld [vmem:[#allocation4] sm:$0xff]
    %vm101 = vcmask 64512
    %v103 = vsel %vm101, %v99, 0
    %105 = vmatprep.subr.mxu0 0.0
    %106 = vmatpush1.msra.mxu0 0.0
    %107 = vmatprep.subr.mxu0 0.0
    %108 = vmatpush1.msra.mxu0 0.0
    %109 = vmatprep.subr.mxu0 0.0
    %110 = vmatpush1.msra.mxu0 0.0
    %111 = vmatprep.subr.mxu0 0.0
    %112 = vmatpush1.msra.mxu0 0.0
    %113 = vmatprep.subr.mxu0 0.0
    %114 = vmatpush1.msra.mxu0 0.0
    %115 = vmatprep.subr.mxu0 0.0
    %116 = vmatpush1.msra.mxu0 0.0
    %117 = vmatprep.subr.mxu0 0.0
    %118 = vmatpush1.msra.mxu0 0.0
    %119 = vmatprep.subr.mxu0 0.0
    %120 = vmatpush1.msra.mxu0 0.0
    %121 = vmatprep.subr.mxu0 0.0
    %122 = vmatpush1.msra.mxu0 0.0
    %123 = vmatprep.subr.mxu0 0.0
    %124 = vmatpush1.msra.mxu0 0.0
    %125 = vmatprep.subr.mxu0 0.0
    %126 = vmatpush1.msra.mxu0 0.0
    %127 = vmatprep.subr.mxu0 0.0
    %128 = vmatpush1.msra.mxu0 0.0
    %129 = vmatprep.subr.mxu0 0.0
    %130 = vmatpush1.msra.mxu0 0.0
    %131 = vmatprep.subr.mxu0 0.0
    %132 = vmatpush1.msra.mxu0 0.0
    %133 = vmatprep.subr.mxu0 0.0
    %134 = vmatpush1.msra.mxu0 0.0
    %135 = vmatprep.subr.mxu0 0.0
    %136 = vmatpush1.msra.mxu0 %v100
    %137 = vmatprep.subr.mxu0 0.0
    %138 = vmatpush2.msra.mxu0 0.0
    %139 = vmatprep.subr.mxu0 0.0
    %140 = vmatpush2.msra.mxu0 0.0
    %141 = vmatprep.subr.mxu0 0.0
    %142 = vmatpush2.msra.mxu0 0.0
    %143 = vmatprep.subr.mxu0 0.0
    %144 = vmatpush2.msra.mxu0 0.0
    %145 = vmatprep.subr.mxu0 0.0
    %146 = vmatpush2.msra.mxu0 0.0
    %147 = vmatprep.subr.mxu0 0.0
    %148 = vmatpush2.msra.mxu0 0.0
    %149 = vmatprep.subr.mxu0 0.0
    %150 = vmatpush2.msra.mxu0 0.0
    %151 = vmatprep.subr.mxu0 0.0
    %152 = vmatpush2.msra.mxu0 0.0
    %153 = vmatprep.subr.mxu0 0.0
    %154 = vmatpush2.msra.mxu0 0.0
    %155 = vmatprep.subr.mxu0 0.0
    %156 = vmatpush2.msra.mxu0 0.0
    %157 = vmatprep.subr.mxu0 0.0
    %158 = vmatpush2.msra.mxu0 0.0
    %159 = vmatprep.subr.mxu0 0.0
    %160 = vmatpush2.msra.mxu0 0.0
    %161 = vmatprep.subr.mxu0 0.0
    %162 = vmatpush2.msra.mxu0 0.0
    %163 = vmatprep.subr.mxu0 0.0
    %164 = vmatpush2.msra.mxu0 0.0
    %165 = vmatprep.subr.mxu0 0.0
    %166 = vmatpush2.msra.mxu0 0.0
    %167 = vmatprep.subr.mxu0 0.0
    %168 = vmatpush2.msra.mxu0 0.0
    %169 = vmatprep.mubr.f32.mxu0 0.0
    %170 = vmatmul.mubr.f32.gmra.mxu0 %v103
    %v171 = vpop.f32.mrf.mxu0
    %v172 = vadd.f32 0.0, %v171
    %v173 = vpop.f32.mrf.mxu0
    %174 = vdwg.mxu0
    %v175 = vmul.f32 %v94, %v172
    %vm176 = vcmask 1041408
    %v177 = vsel %vm176, %v175, 0.0
    %v178 = vrot.slane %v177, 4
    %v179 = vadd.f32 %v177, %v178
    %v180 = vrot.slane %v179, 2
    %v181 = vadd.f32 %v179, %v180
    %v182 = vrot.slane %v181, 1
    %v183 = vadd.f32 %v181, %v182
    %v184 = vmul.f32 %v175, %v94
    %v185 = vsel %vm176, %v184, 0.0
    %v186 = vrot.slane %v185, 4
    %v187 = vadd.f32 %v185, %v186
    %v188 = vrot.slane %v187, 2
    %v189 = vadd.f32 %v187, %v188
    %v190 = vrot.slane %v189, 1
    %v191 = vadd.f32 %v189, %v190
    %v192 = vld [vmem:[#allocation4 + $0xa] sm:$0xff]
    %v193 = vld [vmem:[#allocation4 + $0x12] sm:$0xff]
    %v194 = vld [vmem:[#allocation4 + $0x1a] sm:$0xff]
    %v195 = vld [vmem:[#allocation4 + $0x22] sm:$0xff]
    %v196 = vld [vmem:[#allocation4 + $0x2a] sm:$0xff]
    %v197 = vld [vmem:[#allocation4 + $0x32] sm:$0xff]
    %v198 = vld [vmem:[#allocation4 + $0x3a] sm:$0xff]
    %v199 = vld [vmem:[#allocation4 + $0x42] sm:$0xff]
    %v200 = vld [vmem:[#allocation4 + $0x4a] sm:$0xff]
    %v201 = vld [vmem:[#allocation4 + $0x52] sm:$0xff]
    %v202 = vld [vmem:[#allocation4 + $0x5a] sm:$0xff]
    %v203 = vld [vmem:[#allocation4 + $0x62] sm:$0xff]
    %v204 = vld [vmem:[#allocation4 + $0x6a] sm:$0xff]
    %v205 = vld [vmem:[#allocation4 + $0x72] sm:$0xff]
    %v206 = vld [vmem:[#allocation4 + $0x7a] sm:$0xff]
    %v207 = vld [vmem:[#allocation4 + $0x82] sm:$0xff]
    %208 = vmatprep.subr.mxu0 0.0
    %209 = vmatpush1.msra.mxu0 %v207
    %210 = vmatprep.subr.mxu0 0.0
    %211 = vmatpush1.msra.mxu0 %v206
    %212 = vmatprep.subr.mxu0 0.0
    %213 = vmatpush1.msra.mxu0 %v205
    %214 = vmatprep.subr.mxu0 0.0
    %215 = vmatpush1.msra.mxu0 %v204
    %216 = vmatprep.subr.mxu0 0.0
    %217 = vmatpush1.msra.mxu0 %v203
    %218 = vmatprep.subr.mxu0 0.0
    %219 = vmatpush1.msra.mxu0 %v202
    %220 = vmatprep.subr.mxu0 0.0
    %221 = vmatpush1.msra.mxu0 %v201
    %222 = vmatprep.subr.mxu0 0.0
    %223 = vmatpush1.msra.mxu0 %v200
    %224 = vmatprep.subr.mxu0 0.0
    %225 = vmatpush1.msra.mxu0 %v199
    %226 = vmatprep.subr.mxu0 0.0
    %227 = vmatpush1.msra.mxu0 %v198
    %228 = vmatprep.subr.mxu0 0.0
    %229 = vmatpush1.msra.mxu0 %v197
    %230 = vmatprep.subr.mxu0 0.0
    %231 = vmatpush1.msra.mxu0 %v196
    %232 = vmatprep.subr.mxu0 0.0
    %233 = vmatpush1.msra.mxu0 %v195
    %234 = vmatprep.subr.mxu0 0.0
    %235 = vmatpush1.msra.mxu0 %v194
    %236 = vmatprep.subr.mxu0 0.0
    %237 = vmatpush1.msra.mxu0 %v193
    %238 = vmatprep.subr.mxu0 0.0
    %239 = vmatpush1.msra.mxu0 %v192
    %240 = vmatprep.subr.mxu0 0.0
    %241 = vmatpush2.msra.mxu0 0.0
    %242 = vmatprep.subr.mxu0 0.0
    %243 = vmatpush2.msra.mxu0 0.0
    %244 = vmatprep.subr.mxu0 0.0
    %245 = vmatpush2.msra.mxu0 0.0
    %246 = vmatprep.subr.mxu0 0.0
    %247 = vmatpush2.msra.mxu0 0.0
    %248 = vmatprep.subr.mxu0 0.0
    %249 = vmatpush2.msra.mxu0 0.0
    %250 = vmatprep.subr.mxu0 0.0
    %251 = vmatpush2.msra.mxu0 0.0
    %252 = vmatprep.subr.mxu0 0.0
    %253 = vmatpush2.msra.mxu0 0.0
    %254 = vmatprep.subr.mxu0 0.0
    %255 = vmatpush2.msra.mxu0 0.0
    %256 = vmatprep.subr.mxu0 0.0
    %257 = vmatpush2.msra.mxu0 0.0
    %258 = vmatprep.subr.mxu0 0.0
    %259 = vmatpush2.msra.mxu0 0.0
    %260 = vmatprep.subr.mxu0 0.0
    %261 = vmatpush2.msra.mxu0 0.0
    %262 = vmatprep.subr.mxu0 0.0
    %263 = vmatpush2.msra.mxu0 0.0
    %264 = vmatprep.subr.mxu0 0.0
    %265 = vmatpush2.msra.mxu0 0.0
    %266 = vmatprep.subr.mxu0 0.0
    %267 = vmatpush2.msra.mxu0 0.0
    %268 = vmatprep.subr.mxu0 0.0
    %269 = vmatpush2.msra.mxu0 0.0
    %270 = vmatprep.subr.mxu0 0.0
    %271 = vmatpush2.msra.mxu0 0.0
    %272 = vmatprep.mubr.f32.mxu0 0.0
    %273 = vmatmul.mubr.f32.gmra.mxu0 %v183
    %v274 = vpop.f32.mrf.mxu0
    %v275 = vadd.f32 0.0, %v274
    %v276 = vpop.f32.mrf.mxu0
    %277 = vdwg.mxu0
    %v278 = vmul.f32 %v275, 0.0625
    %279 = vmatprep.subr.mxu0 0.0
    %280 = vmatpush1.msra.mxu0 %v207
    %281 = vmatprep.subr.mxu0 0.0
    %282 = vmatpush1.msra.mxu0 %v206
    %283 = vmatprep.subr.mxu0 0.0
    %284 = vmatpush1.msra.mxu0 %v205
    %285 = vmatprep.subr.mxu0 0.0
    %286 = vmatpush1.msra.mxu0 %v204
    %287 = vmatprep.subr.mxu0 0.0
    %288 = vmatpush1.msra.mxu0 %v203
    %289 = vmatprep.subr.mxu0 0.0
    %290 = vmatpush1.msra.mxu0 %v202
    %291 = vmatprep.subr.mxu0 0.0
    %292 = vmatpush1.msra.mxu0 %v201
    %293 = vmatprep.subr.mxu0 0.0
    %294 = vmatpush1.msra.mxu0 %v200
    %295 = vmatprep.subr.mxu0 0.0
    %296 = vmatpush1.msra.mxu0 %v199
    %297 = vmatprep.subr.mxu0 0.0
    %298 = vmatpush1.msra.mxu0 %v198
    %299 = vmatprep.subr.mxu0 0.0
    %300 = vmatpush1.msra.mxu0 %v197
    %301 = vmatprep.subr.mxu0 0.0
    %302 = vmatpush1.msra.mxu0 %v196
    %303 = vmatprep.subr.mxu0 0.0
    %304 = vmatpush1.msra.mxu0 %v195
    %305 = vmatprep.subr.mxu0 0.0
    %306 = vmatpush1.msra.mxu0 %v194
    %307 = vmatprep.subr.mxu0 0.0
    %308 = vmatpush1.msra.mxu0 %v193
    %309 = vmatprep.subr.mxu0 0.0
    %310 = vmatpush1.msra.mxu0 %v192
    %311 = vmatprep.subr.mxu0 0.0
    %312 = vmatpush2.msra.mxu0 0.0
    %313 = vmatprep.subr.mxu0 0.0
    %314 = vmatpush2.msra.mxu0 0.0
    %315 = vmatprep.subr.mxu0 0.0
    %316 = vmatpush2.msra.mxu0 0.0
    %317 = vmatprep.subr.mxu0 0.0
    %318 = vmatpush2.msra.mxu0 0.0
    %319 = vmatprep.subr.mxu0 0.0
    %320 = vmatpush2.msra.mxu0 0.0
    %321 = vmatprep.subr.mxu0 0.0
    %322 = vmatpush2.msra.mxu0 0.0
    %323 = vmatprep.subr.mxu0 0.0
    %324 = vmatpush2.msra.mxu0 0.0
    %325 = vmatprep.subr.mxu0 0.0
    %326 = vmatpush2.msra.mxu0 0.0
    %327 = vmatprep.subr.mxu0 0.0
    %328 = vmatpush2.msra.mxu0 0.0
    %329 = vmatprep.subr.mxu0 0.0
    %330 = vmatpush2.msra.mxu0 0.0
    %331 = vmatprep.subr.mxu0 0.0
    %332 = vmatpush2.msra.mxu0 0.0
    %333 = vmatprep.subr.mxu0 0.0
    %334 = vmatpush2.msra.mxu0 0.0
    %335 = vmatprep.subr.mxu0 0.0
    %336 = vmatpush2.msra.mxu0 0.0
    %337 = vmatprep.subr.mxu0 0.0
    %338 = vmatpush2.msra.mxu0 0.0
    %339 = vmatprep.subr.mxu0 0.0
    %340 = vmatpush2.msra.mxu0 0.0
    %341 = vmatprep.subr.mxu0 0.0
    %342 = vmatpush2.msra.mxu0 0.0
    %343 = vmatprep.mubr.f32.mxu0 0.0
    %344 = vmatmul.mubr.f32.gmra.mxu0 %v191
    %v345 = vpop.f32.mrf.mxu0
    %v346 = vadd.f32 0.0, %v345
    %v347 = vpop.f32.mrf.mxu0
    %348 = vdwg.mxu0
    %v349 = vmul.f32 %v346, 0.0625
    %v350 = vmul.f32 %v278, %v278
    %v351 = vsub.f32 %v349, %v350
    %v352 = vld [vmem:[#allocation4 + $0x8] sm:$0x1]
    %v353 = vadd.f32 %v351, 1e-05
    %v354 = vrsqrt.pop %v353
    %v355 = vmul.f32 %v352, %v354
    %v356 = vld [vmem:[#allocation4 + $0x9] sm:$0x1]
    %v357 = vmul.f32 %v278, %v355
    %v358 = vsub.f32 %v356, %v357
    %v359 = vlaneseq
    %v360 = vshrl.u32 %v359, 7
    %v361 = vsub.s32 0, %v360
    %v362 = vrot.slane %v355, %v361
    %v363 = vmul.f32 %v94, %v362
    %v364 = vlaneseq
    %v365 = vshrl.u32 %v364, 7
    %v366 = vsub.s32 0, %v365
    %v367 = vrot.slane %v358, %v366
    %v368 = vadd.f32 %v363, %v367
    %v369 = vmax.f32 %v368, 0.0
    %v370 = vpack.c.bf16 %v369, %v369
    %371 = vst [vmem:[%s4] sm:$0x1] %v370
    // Predicated region
    $region26: #{conv_generator_forward.4} parent=1 // pred_check
      _
    $region27: #{conv_generator_forward.4} parent=1 // pred_check_branch
      %373 = sbr.rel (0) target = $region29
    $region28: #{conv_generator_forward.4} parent=1 // pred_region
      _
    $region29: #{conv_generator_forward.4} parent=1 // pred_fallthru
      _
    // Predicated region
    $region30: #{conv_generator_forward.4} parent=1 // pred_check
      _
    $region31: #{conv_generator_forward.4} parent=1 // pred_check_branch
      %375 = sbr.rel (0) target = $region33
    $region32: #{conv_generator_forward.4} parent=1 // pred_region
      _
    $region33: #{conv_generator_forward.4} parent=1 // pred_fallthru
      _
    %376 = vsyncpa [#allocation3], 1
    %377 = vsyncpa [#allocation5], 1

// kernel: conv_generator_forward.5
$region0: #{conv_generator_forward.5}
  #allocation0 [shape = 'u32[]', space=smem, size = 0x4, offset = 0x4, fixed_abs, tag = 'smem constant byte address 0x4 - core index']
  #allocation1 [shape = 'u32[144,128]{1,0:T(1,128)}', space=vmem, size = 0x12000, scoped, tag = 'internal scratch']
  %s0 = inlined_call_operand.vmem [shape: bf16[54,128], index: 0, kind: input, shape index: {}]
  %s1 = inlined_call_operand.vmem [shape: bf16[128,64], index: 1, kind: input, shape index: {}]
  %s2 = inlined_call_operand.hbm [shape: f32[54,8], index: 2, kind: input, shape index: {}]
  %s3 = inlined_call_operand.vmem [shape: f32[74,64], index: 3, kind: input, shape index: {}]
  %s4 = inlined_call_operand.vmem [shape: bf16[54,64], index: 4, kind: output, shape index: {}]
  %s5 = sld [smem:[#allocation0]]
  $region30: #{conv_generator_forward.5} parent=0
    _
  %s7 = ssub.s32 1, %s5
  %s8 = scalar_select 0, %s7, %s5
  $region1: #{conv_generator_forward.5} parent=0
    #allocation2 [shape = 'u8[28672]{0}', space=vmem, size = 0x7000, scoped, tag = 'input window, operand 2, single buffered']
    #allocation3 [shape = 's32[1]{0}', space=sflag, size = 0x4, scoped, tag = 'scoped memory for conv_generator_forward.5']
    %9 = vsyncpa [#allocation3], 0
    // Predicated region
    $region2: #{conv_generator_forward.5} parent=1 // pred_check
      _
    $region3: #{conv_generator_forward.5} parent=1 // pred_check_branch
      %11 = sbr.rel (0) target = $region5
    $region4: #{conv_generator_forward.5} parent=1 // pred_region
      _
    $region5: #{conv_generator_forward.5} parent=1 // pred_fallthru
      _
    // Predicated region
    $region6: #{conv_generator_forward.5} parent=1 // pred_check
      _
    $region7: #{conv_generator_forward.5} parent=1 // pred_check_branch
      %13 = sbr.rel (0) target = $region9
    $region8: #{conv_generator_forward.5} parent=1 // pred_region
      _
    $region9: #{conv_generator_forward.5} parent=1 // pred_fallthru
      _
    // Predicated region
    $region10: #{conv_generator_forward.5} parent=1 // pred_check
      _
    $region11: #{conv_generator_forward.5} parent=1 // pred_check_branch
      %15 = sbr.rel (0) target = $region13
    $region12: #{conv_generator_forward.5} parent=1 // pred_region
      %s17 = ssub.s32 896, 896
      %18 = vsyncadd [#allocation3], %s17
      %s19 = sshll.u32 [#allocation2], 4
      %s20 = int_to_ptr.vmem [resolvable:$true] %s19
      %25 = dma.hbm_to_vmem [thread:$0]  %s2, 896, %s20, [#allocation3], 128, 128, 8
    $region13: #{conv_generator_forward.5} parent=1 // pred_fallthru
      _
    // Predicated region
    $region14: #{conv_generator_forward.5} parent=1 // pred_check
      _
    $region15: #{conv_generator_forward.5} parent=1 // pred_check_branch
      %27 = sbr.rel (0) target = $region17
    $region16: #{conv_generator_forward.5} parent=1 // pred_region
      _
    $region17: #{conv_generator_forward.5} parent=1 // pred_fallthru
      _
    // Predicated region
    $region18: #{conv_generator_forward.5} parent=1 // pred_check
      _
    $region19: #{conv_generator_forward.5} parent=1 // pred_check_branch
      %29 = sbr.rel (0) target = $region21
    $region20: #{conv_generator_forward.5} parent=1 // pred_region
      %30 = dma.done [#allocation3], 896
    $region21: #{conv_generator_forward.5} parent=1 // pred_fallthru
      _
    %v32 = vld [vmem:[%s0] sm:$0xf]
    %v33 = vld [vmem:[%s0 + $0x4] sm:$0xf]
    %v34 = vld [vmem:[%s0 + $0x8] sm:$0xf]
    %v35 = vld [vmem:[%s0 + $0xc] sm:$0xf]
    %v36 = vld [vmem:[%s0 + $0x10] sm:$0xf]
    %v37 = vld [vmem:[%s0 + $0x14] sm:$0xf]
    %v38 = vld [vmem:[%s0 + $0x18] sm:$0x7]
    %v39 = vld [vmem:[%s1] sm:$0xf]
    %v40 = vld [vmem:[%s1 + $0x4] sm:$0xf]
    %v41 = vld [vmem:[%s1 + $0x8] sm:$0xf]
    %v42 = vld [vmem:[%s1 + $0xc] sm:$0xf]
    %v43 = vld [vmem:[%s1 + $0x10] sm:$0xf]
    %v44 = vld [vmem:[%s1 + $0x14] sm:$0xf]
    %v45 = vld [vmem:[%s1 + $0x18] sm:$0xf]
    %v46 = vld [vmem:[%s1 + $0x1c] sm:$0xf]
    %v47 = vld [vmem:[%s1 + $0x20] sm:$0xf]
    %v48 = vld [vmem:[%s1 + $0x24] sm:$0xf]
    %v49 = vld [vmem:[%s1 + $0x28] sm:$0xf]
    %v50 = vld [vmem:[%s1 + $0x2c] sm:$0xf]
    %v51 = vld [vmem:[%s1 + $0x30] sm:$0xf]
    %v52 = vld [vmem:[%s1 + $0x34] sm:$0xf]
    %v53 = vld [vmem:[%s1 + $0x38] sm:$0xf]
    %v54 = vld [vmem:[%s1 + $0x3c] sm:$0xf]
    %v62 = vunpack.c.l.b16 %v32
    %v63 = vunpack.c.l.b16 %v33
    %v64 = vunpack.c.l.b16 %v34
    %v65 = vunpack.c.l.b16 %v35
    %v66 = vunpack.c.l.b16 %v36
    %v67 = vunpack.c.l.b16 %v37
    %v68 = vunpack.c.l.b16 %v38
    %v69 = vpack.c.b16 %v63, %v62
    %v70 = vpack.c.b16 %v65, %v64
    %v71 = vpack.c.b16 %v67, %v66
    %v72 = vpack.c.b16 %v68, %v68
    %v93 = vunpack.c.l.b16 %v39
    %v94 = vunpack.c.l.b16 %v40
    %v95 = vunpack.c.l.b16 %v41
    %v96 = vunpack.c.l.b16 %v42
    %v97 = vunpack.c.l.b16 %v43
    %v98 = vunpack.c.l.b16 %v44
    %v99 = vunpack.c.l.b16 %v45
    %v100 = vunpack.c.l.b16 %v46
    %v101 = vunpack.c.l.b16 %v47
    %v102 = vunpack.c.l.b16 %v48
    %v103 = vunpack.c.l.b16 %v49
    %v104 = vunpack.c.l.b16 %v50
    %v105 = vunpack.c.l.b16 %v51
    %v106 = vunpack.c.l.b16 %v52
    %v107 = vunpack.c.l.b16 %v53
    %v108 = vunpack.c.l.b16 %v54
    %v109 = vpack.c.b16 %v94, %v93
    %v110 = vpack.c.b16 %v96, %v95
    %v111 = vpack.c.b16 %v98, %v97
    %v112 = vpack.c.b16 %v100, %v99
    %v113 = vpack.c.b16 %v102, %v101
    %v114 = vpack.c.b16 %v104, %v103
    %v115 = vpack.c.b16 %v106, %v105
    %v116 = vpack.c.b16 %v108, %v107
    %125 = vmatprep.subr.bf16.mxu0 0
    %126 = vmatpush1.bf16.msra.mxu0 %v116
    %127 = vmatprep.subr.bf16.mxu0 0
    %128 = vmatpush1.bf16.msra.mxu0 %v115
    %129 = vmatprep.subr.bf16.mxu0 0
    %130 = vmatpush1.bf16.msra.mxu0 %v114
    %131 = vmatprep.subr.bf16.mxu0 0
    %132 = vmatpush1.bf16.msra.mxu0 %v113
    %133 = vmatprep.subr.bf16.mxu0 0
    %134 = vmatpush1.bf16.msra.mxu0 %v112
    %135 = vmatprep.subr.bf16.mxu0 0
    %136 = vmatpush1.bf16.msra.mxu0 %v111
    %137 = vmatprep.subr.bf16.mxu0 0
    %138 = vmatpush1.bf16.msra.mxu0 %v110
    %139 = vmatprep.subr.bf16.mxu0 0
    %140 = vmatpush1.bf16.msra.mxu0 %v109
    %141 = vmatprep.subr.bf16.mxu0 0
    %142 = vmatpush2.bf16.msra.mxu0 0
    %143 = vmatprep.subr.bf16.mxu0 0
    %144 = vmatpush2.bf16.msra.mxu0 0
    %145 = vmatprep.subr.bf16.mxu0 0
    %146 = vmatpush2.bf16.msra.mxu0 0
    %147 = vmatprep.subr.bf16.mxu0 0
    %148 = vmatpush2.bf16.msra.mxu0 0
    %149 = vmatprep.subr.bf16.mxu0 0
    %150 = vmatpush2.bf16.msra.mxu0 0
    %151 = vmatprep.subr.bf16.mxu0 0
    %152 = vmatpush2.bf16.msra.mxu0 0
    %153 = vmatprep.subr.bf16.mxu0 0
    %154 = vmatpush2.bf16.msra.mxu0 0
    %155 = vmatprep.subr.bf16.mxu0 0
    %156 = vmatpush2.bf16.msra.mxu0 0
    %157 = vmatprep.mubr.bf16.mxu0 0
    %158 = vmatmul.mubr.bf16.gmra.mxu0 %v69
    %v159 = vpop.f32.mrf.mxu0
    %v160 = vadd.f32 0.0, %v159
    %v161 = vpop.f32.mrf.mxu0
    %v162 = vpop.f32.mrf.mxu0
    %v163 = vadd.f32 0.0, %v162
    %v164 = vpop.f32.mrf.mxu0
    %165 = vmatprep.mubr.bf16.mxu0 0
    %166 = vmatmul.mubr.bf16.gmra.mxu0 %v70
    %v167 = vpop.f32.mrf.mxu0
    %v168 = vadd.f32 0.0, %v167
    %v169 = vpop.f32.mrf.mxu0
    %v170 = vpop.f32.mrf.mxu0
    %v171 = vadd.f32 0.0, %v170
    %v172 = vpop.f32.mrf.mxu0
    %173 = vmatprep.mubr.bf16.mxu0 0
    %174 = vmatmul.mubr.bf16.gmra.mxu0 %v71
    %v175 = vpop.f32.mrf.mxu0
    %v176 = vadd.f32 0.0, %v175
    %v177 = vpop.f32.mrf.mxu0
    %v178 = vpop.f32.mrf.mxu0
    %v179 = vadd.f32 0.0, %v178
    %v180 = vpop.f32.mrf.mxu0
    %181 = vmatprep.mubr.bf16.mxu0 0
    %182 = vmatmul.mubr.bf16.gmra.mxu0 %v72
    %v183 = vpop.f32.mrf.mxu0
    %v184 = vadd.f32 0.0, %v183
    %v185 = vpop.f32.mrf.mxu0
    %v186 = vpop.f32.mrf.mxu0
    %v187 = vpop.f32.mrf.mxu0
    %188 = vdwg.mxu0
    %v189 = vld [vmem:[#allocation2] sm:$0xff]
    %v190 = vld [vmem:[#allocation2 + $0x8] sm:$0xff]
    %v191 = vld [vmem:[#allocation2 + $0x10] sm:$0xff]
    %v192 = vld [vmem:[#allocation2 + $0x18] sm:$0xff]
    %v193 = vld [vmem:[#allocation2 + $0x20] sm:$0xff]
    %v194 = vld [vmem:[#allocation2 + $0x28] sm:$0xff]
    %v195 = vld [vmem:[#allocation2 + $0x30] sm:$0x3f]
    %v196 = vld [vmem:[%s3] sm:$0xff]
    %vm197 = vcmask 64512
    %v199 = vsel %vm197, %v189, 0
    %v202 = vsel %vm197, %v190, 0
    %v205 = vsel %vm197, %v191, 0
    %v208 = vsel %vm197, %v192, 0
    %v211 = vsel %vm197, %v193, 0
    %v214 = vsel %vm197, %v194, 0
    %v217 = vsel %vm197, %v195, 0
    %219 = vmatprep.subr.mxu0 0.0
    %220 = vmatpush1.msra.mxu0 0.0
    %221 = vmatprep.subr.mxu0 0.0
    %222 = vmatpush1.msra.mxu0 0.0
    %223 = vmatprep.subr.mxu0 0.0
    %224 = vmatpush1.msra.mxu0 0.0
    %225 = vmatprep.subr.mxu0 0.0
    %226 = vmatpush1.msra.mxu0 0.0
    %227 = vmatprep.subr.mxu0 0.0
    %228 = vmatpush1.msra.mxu0 0.0
    %229 = vmatprep.subr.mxu0 0.0
    %230 = vmatpush1.msra.mxu0 0.0
    %231 = vmatprep.subr.mxu0 0.0
    %232 = vmatpush1.msra.mxu0 0.0
    %233 = vmatprep.subr.mxu0 0.0
    %234 = vmatpush1.msra.mxu0 0.0
    %235 = vmatprep.subr.mxu0 0.0
    %236 = vmatpush1.msra.mxu0 0.0
    %237 = vmatprep.subr.mxu0 0.0
    %238 = vmatpush1.msra.mxu0 0.0
    %239 = vmatprep.subr.mxu0 0.0
    %240 = vmatpush1.msra.mxu0 0.0
    %241 = vmatprep.subr.mxu0 0.0
    %242 = vmatpush1.msra.mxu0 0.0
    %243 = vmatprep.subr.mxu0 0.0
    %244 = vmatpush1.msra.mxu0 0.0
    %245 = vmatprep.subr.mxu0 0.0
    %246 = vmatpush1.msra.mxu0 0.0
    %247 = vmatprep.subr.mxu0 0.0
    %248 = vmatpush1.msra.mxu0 0.0
    %249 = vmatprep.subr.mxu0 0.0
    %250 = vmatpush1.msra.mxu0 %v196
    %251 = vmatprep.subr.mxu0 0.0
    %252 = vmatpush2.msra.mxu0 0.0
    %253 = vmatprep.subr.mxu0 0.0
    %254 = vmatpush2.msra.mxu0 0.0
    %255 = vmatprep.subr.mxu0 0.0
    %256 = vmatpush2.msra.mxu0 0.0
    %257 = vmatprep.subr.mxu0 0.0
    %258 = vmatpush2.msra.mxu0 0.0
    %259 = vmatprep.subr.mxu0 0.0
    %260 = vmatpush2.msra.mxu0 0.0
    %261 = vmatprep.subr.mxu0 0.0
    %262 = vmatpush2.msra.mxu0 0.0
    %263 = vmatprep.subr.mxu0 0.0
    %264 = vmatpush2.msra.mxu0 0.0
    %265 = vmatprep.subr.mxu0 0.0
    %266 = vmatpush2.msra.mxu0 0.0
    %267 = vmatprep.subr.mxu0 0.0
    %268 = vmatpush2.msra.mxu0 0.0
    %269 = vmatprep.subr.mxu0 0.0
    %270 = vmatpush2.msra.mxu0 0.0
    %271 = vmatprep.subr.mxu0 0.0
    %272 = vmatpush2.msra.mxu0 0.0
    %273 = vmatprep.subr.mxu0 0.0
    %274 = vmatpush2.msra.mxu0 0.0
    %275 = vmatprep.subr.mxu0 0.0
    %276 = vmatpush2.msra.mxu0 0.0
    %277 = vmatprep.subr.mxu0 0.0
    %278 = vmatpush2.msra.mxu0 0.0
    %279 = vmatprep.subr.mxu0 0.0
    %280 = vmatpush2.msra.mxu0 0.0
    %281 = vmatprep.subr.mxu0 0.0
    %282 = vmatpush2.msra.mxu0 0.0
    %283 = vmatprep.mubr.f32.mxu0 0.0
    %284 = vmatmul.mubr.f32.gmra.mxu0 %v199
    %v285 = vpop.f32.mrf.mxu0
    %v286 = vadd.f32 0.0, %v285
    %v287 = vpop.f32.mrf.mxu0
    %288 = vmatprep.mubr.f32.mxu0 0.0
    %289 = vmatmul.mubr.f32.gmra.mxu0 %v202
    %v290 = vpop.f32.mrf.mxu0
    %v291 = vadd.f32 0.0, %v290
    %v292 = vpop.f32.mrf.mxu0
    %293 = vmatprep.mubr.f32.mxu0 0.0
    %294 = vmatmul.mubr.f32.gmra.mxu0 %v205
    %v295 = vpop.f32.mrf.mxu0
    %v296 = vadd.f32 0.0, %v295
    %v297 = vpop.f32.mrf.mxu0
    %298 = vmatprep.mubr.f32.mxu0 0.0
    %299 = vmatmul.mubr.f32.gmra.mxu0 %v208
    %v300 = vpop.f32.mrf.mxu0
    %v301 = vadd.f32 0.0, %v300
    %v302 = vpop.f32.mrf.mxu0
    %303 = vmatprep.mubr.f32.mxu0 0.0
    %304 = vmatmul.mubr.f32.gmra.mxu0 %v211
    %v305 = vpop.f32.mrf.mxu0
    %v306 = vadd.f32 0.0, %v305
    %v307 = vpop.f32.mrf.mxu0
    %308 = vmatprep.mubr.f32.mxu0 0.0
    %309 = vmatmul.mubr.f32.gmra.mxu0 %v214
    %v310 = vpop.f32.mrf.mxu0
    %v311 = vadd.f32 0.0, %v310
    %v312 = vpop.f32.mrf.mxu0
    %313 = vmatprep.mubr.f32.mxu0 0.0
    %314 = vmatmul.mubr.f32.gmra.mxu0 %v217
    %v315 = vpop.f32.mrf.mxu0
    %v316 = vadd.f32 0.0, %v315
    %v317 = vpop.f32.mrf.mxu0
    %318 = vdwg.mxu0
    %v319 = vmul.f32 %v160, %v286
    %v320 = vmul.f32 %v163, %v291
    %v321 = vmul.f32 %v168, %v296
    %v322 = vmul.f32 %v171, %v301
    %v323 = vmul.f32 %v176, %v306
    %v324 = vmul.f32 %v179, %v311
    %v325 = vmul.f32 %v184, %v316
    %vm326 = vcmask 523264
    %v327 = vsel %vm326, %v319, 0.0
    %v328 = vsel %vm326, %v320, 0.0
    %v329 = vadd.f32 %v327, %v328
    %v330 = vsel %vm326, %v321, 0.0
    %v331 = vadd.f32 %v329, %v330
    %v332 = vsel %vm326, %v322, 0.0
    %v333 = vadd.f32 %v331, %v332
    %v334 = vsel %vm326, %v323, 0.0
    %v335 = vadd.f32 %v333, %v334
    %v336 = vsel %vm326, %v324, 0.0
    %v337 = vadd.f32 %v335, %v336
    %vm338 = vcmask 521216
    %v339 = vsel %vm338, %v325, 0.0
    %v340 = vadd.f32 %v337, %v339
    %v341 = vrot.slane %v340, 4
    %v342 = vadd.f32 %v340, %v341
    %v343 = vrot.slane %v342, 2
    %v344 = vadd.f32 %v342, %v343
    %v345 = vrot.slane %v344, 1
    %v346 = vadd.f32 %v344, %v345
    %v347 = vmul.f32 %v319, %v160
    %v348 = vmul.f32 %v320, %v163
    %v349 = vmul.f32 %v321, %v168
    %v350 = vmul.f32 %v322, %v171
    %v351 = vmul.f32 %v323, %v176
    %v352 = vmul.f32 %v324, %v179
    %v353 = vmul.f32 %v325, %v184
    %v354 = vsel %vm326, %v347, 0.0
    %v355 = vsel %vm326, %v348, 0.0
    %v356 = vadd.f32 %v354, %v355
    %v357 = vsel %vm326, %v349, 0.0
    %v358 = vadd.f32 %v356, %v357
    %v359 = vsel %vm326, %v350, 0.0
    %v360 = vadd.f32 %v358, %v359
    %v361 = vsel %vm326, %v351, 0.0
    %v362 = vadd.f32 %v360, %v361
    %v363 = vsel %vm326, %v352, 0.0
    %v364 = vadd.f32 %v362, %v363
    %v365 = vsel %vm338, %v353, 0.0
    %v366 = vadd.f32 %v364, %v365
    %v367 = vrot.slane %v366, 4
    %v368 = vadd.f32 %v366, %v367
    %v369 = vrot.slane %v368, 2
    %v370 = vadd.f32 %v368, %v369
    %v371 = vrot.slane %v370, 1
    %v372 = vadd.f32 %v370, %v371
    %v373 = vld [vmem:[%s3 + $0xa] sm:$0xff]
    %v374 = vld [vmem:[%s3 + $0x12] sm:$0xff]
    %v375 = vld [vmem:[%s3 + $0x1a] sm:$0xff]
    %v376 = vld [vmem:[%s3 + $0x22] sm:$0xff]
    %v377 = vld [vmem:[%s3 + $0x2a] sm:$0xff]
    %v378 = vld [vmem:[%s3 + $0x32] sm:$0xff]
    %v379 = vld [vmem:[%s3 + $0x3a] sm:$0xff]
    %v380 = vld [vmem:[%s3 + $0x42] sm:$0xff]
    %v382 = vsel %vm326, %v346, 0
    %384 = vmatprep.subr.mxu0 0.0
    %385 = vmatpush1.msra.mxu0 0.0
    %386 = vmatprep.subr.mxu0 0.0
    %387 = vmatpush1.msra.mxu0 0.0
    %388 = vmatprep.subr.mxu0 0.0
    %389 = vmatpush1.msra.mxu0 0.0
    %390 = vmatprep.subr.mxu0 0.0
    %391 = vmatpush1.msra.mxu0 0.0
    %392 = vmatprep.subr.mxu0 0.0
    %393 = vmatpush1.msra.mxu0 0.0
    %394 = vmatprep.subr.mxu0 0.0
    %395 = vmatpush1.msra.mxu0 0.0
    %396 = vmatprep.subr.mxu0 0.0
    %397 = vmatpush1.msra.mxu0 0.0
    %398 = vmatprep.subr.mxu0 0.0
    %399 = vmatpush1.msra.mxu0 0.0
    %400 = vmatprep.subr.mxu0 0.0
    %401 = vmatpush1.msra.mxu0 %v380
    %402 = vmatprep.subr.mxu0 0.0
    %403 = vmatpush1.msra.mxu0 %v379
    %404 = vmatprep.subr.mxu0 0.0
    %405 = vmatpush1.msra.mxu0 %v378
    %406 = vmatprep.subr.mxu0 0.0
    %407 = vmatpush1.msra.mxu0 %v377
    %408 = vmatprep.subr.mxu0 0.0
    %409 = vmatpush1.msra.mxu0 %v376
    %410 = vmatprep.subr.mxu0 0.0
    %411 = vmatpush1.msra.mxu0 %v375
    %412 = vmatprep.subr.mxu0 0.0
    %413 = vmatpush1.msra.mxu0 %v374
    %414 = vmatprep.subr.mxu0 0.0
    %415 = vmatpush1.msra.mxu0 %v373
    %416 = vmatprep.subr.mxu0 0.0
    %417 = vmatpush2.msra.mxu0 0.0
    %418 = vmatprep.subr.mxu0 0.0
    %419 = vmatpush2.msra.mxu0 0.0
    %420 = vmatprep.subr.mxu0 0.0
    %421 = vmatpush2.msra.mxu0 0.0
    %422 = vmatprep.subr.mxu0 0.0
    %423 = vmatpush2.msra.mxu0 0.0
    %424 = vmatprep.subr.mxu0 0.0
    %425 = vmatpush2.msra.mxu0 0.0
    %426 = vmatprep.subr.mxu0 0.0
    %427 = vmatpush2.msra.mxu0 0.0
    %428 = vmatprep.subr.mxu0 0.0
    %429 = vmatpush2.msra.mxu0 0.0
    %430 = vmatprep.subr.mxu0 0.0
    %431 = vmatpush2.msra.mxu0 0.0
    %432 = vmatprep.subr.mxu0 0.0
    %433 = vmatpush2.msra.mxu0 0.0
    %434 = vmatprep.subr.mxu0 0.0
    %435 = vmatpush2.msra.mxu0 0.0
    %436 = vmatprep.subr.mxu0 0.0
    %437 = vmatpush2.msra.mxu0 0.0
    %438 = vmatprep.subr.mxu0 0.0
    %439 = vmatpush2.msra.mxu0 0.0
    %440 = vmatprep.subr.mxu0 0.0
    %441 = vmatpush2.msra.mxu0 0.0
    %442 = vmatprep.subr.mxu0 0.0
    %443 = vmatpush2.msra.mxu0 0.0
    %444 = vmatprep.subr.mxu0 0.0
    %445 = vmatpush2.msra.mxu0 0.0
    %446 = vmatprep.subr.mxu0 0.0
    %447 = vmatpush2.msra.mxu0 0.0
    %448 = vmatprep.mubr.f32.mxu0 0.0
    %449 = vmatmul.mubr.f32.gmra.mxu0 %v382
    %v450 = vpop.f32.mrf.mxu0
    %v451 = vadd.f32 0.0, %v450
    %v452 = vpop.f32.mrf.mxu0
    %453 = vdwg.mxu0
    %v454 = vmul.f32 %v451, 0.0078125
    %v456 = vsel %vm326, %v372, 0
    %458 = vmatprep.subr.mxu0 0.0
    %459 = vmatpush1.msra.mxu0 0.0
    %460 = vmatprep.subr.mxu0 0.0
    %461 = vmatpush1.msra.mxu0 0.0
    %462 = vmatprep.subr.mxu0 0.0
    %463 = vmatpush1.msra.mxu0 0.0
    %464 = vmatprep.subr.mxu0 0.0
    %465 = vmatpush1.msra.mxu0 0.0
    %466 = vmatprep.subr.mxu0 0.0
    %467 = vmatpush1.msra.mxu0 0.0
    %468 = vmatprep.subr.mxu0 0.0
    %469 = vmatpush1.msra.mxu0 0.0
    %470 = vmatprep.subr.mxu0 0.0
    %471 = vmatpush1.msra.mxu0 0.0
    %472 = vmatprep.subr.mxu0 0.0
    %473 = vmatpush1.msra.mxu0 0.0
    %474 = vmatprep.subr.mxu0 0.0
    %475 = vmatpush1.msra.mxu0 %v380
    %476 = vmatprep.subr.mxu0 0.0
    %477 = vmatpush1.msra.mxu0 %v379
    %478 = vmatprep.subr.mxu0 0.0
    %479 = vmatpush1.msra.mxu0 %v378
    %480 = vmatprep.subr.mxu0 0.0
    %481 = vmatpush1.msra.mxu0 %v377
    %482 = vmatprep.subr.mxu0 0.0
    %483 = vmatpush1.msra.mxu0 %v376
    %484 = vmatprep.subr.mxu0 0.0
    %485 = vmatpush1.msra.mxu0 %v375
    %486 = vmatprep.subr.mxu0 0.0
    %487 = vmatpush1.msra.mxu0 %v374
    %488 = vmatprep.subr.mxu0 0.0
    %489 = vmatpush1.msra.mxu0 %v373
    %490 = vmatprep.subr.mxu0 0.0
    %491 = vmatpush2.msra.mxu0 0.0
    %492 = vmatprep.subr.mxu0 0.0
    %493 = vmatpush2.msra.mxu0 0.0
    %494 = vmatprep.subr.mxu0 0.0
    %495 = vmatpush2.msra.mxu0 0.0
    %496 = vmatprep.subr.mxu0 0.0
    %497 = vmatpush2.msra.mxu0 0.0
    %498 = vmatprep.subr.mxu0 0.0
    %499 = vmatpush2.msra.mxu0 0.0
    %500 = vmatprep.subr.mxu0 0.0
    %501 = vmatpush2.msra.mxu0 0.0
    %502 = vmatprep.subr.mxu0 0.0
    %503 = vmatpush2.msra.mxu0 0.0
    %504 = vmatprep.subr.mxu0 0.0
    %505 = vmatpush2.msra.mxu0 0.0
    %506 = vmatprep.subr.mxu0 0.0
    %507 = vmatpush2.msra.mxu0 0.0
    %508 = vmatprep.subr.mxu0 0.0
    %509 = vmatpush2.msra.mxu0 0.0
    %510 = vmatprep.subr.mxu0 0.0
    %511 = vmatpush2.msra.mxu0 0.0
    %512 = vmatprep.subr.mxu0 0.0
    %513 = vmatpush2.msra.mxu0 0.0
    %514 = vmatprep.subr.mxu0 0.0
    %515 = vmatpush2.msra.mxu0 0.0
    %516 = vmatprep.subr.mxu0 0.0
    %517 = vmatpush2.msra.mxu0 0.0
    %518 = vmatprep.subr.mxu0 0.0
    %519 = vmatpush2.msra.mxu0 0.0
    %520 = vmatprep.subr.mxu0 0.0
    %521 = vmatpush2.msra.mxu0 0.0
    %522 = vmatprep.mubr.f32.mxu0 0.0
    %523 = vmatmul.mubr.f32.gmra.mxu0 %v456
    %v524 = vpop.f32.mrf.mxu0
    %v525 = vadd.f32 0.0, %v524
    %v526 = vpop.f32.mrf.mxu0
    %527 = vdwg.mxu0
    %v528 = vmul.f32 %v525, 0.0078125
    %v529 = vmul.f32 %v454, %v454
    %v530 = vsub.f32 %v528, %v529
    %v531 = vld [vmem:[%s3 + $0x8] sm:$0x1]
    %v532 = vadd.f32 %v530, 1e-05
    %v533 = vrsqrt.pop %v532
    %v534 = vmul.f32 %v531, %v533
    %v535 = vld [vmem:[%s3 + $0x9] sm:$0x1]
    %v536 = vmul.f32 %v454, %v534
    %v537 = vsub.f32 %v535, %v536
    %v538 = vlaneseq
    %v539 = vshrl.u32 %v538, 7
    %v540 = vsub.s32 0, %v539
    %v541 = vrot.slane %v534, %v540
    %v542 = vmul.f32 %v160, %v541
    %v543 = vmul.f32 %v163, %v541
    %v544 = vmul.f32 %v168, %v541
    %v545 = vmul.f32 %v171, %v541
    %v546 = vmul.f32 %v176, %v541
    %v547 = vmul.f32 %v179, %v541
    %v548 = vmul.f32 %v184, %v541
    %v549 = vlaneseq
    %v550 = vshrl.u32 %v549, 7
    %v551 = vsub.s32 0, %v550
    %v552 = vrot.slane %v537, %v551
    %v553 = vadd.f32 %v542, %v552
    %v554 = vadd.f32 %v543, %v552
    %v555 = vadd.f32 %v544, %v552
    %v556 = vadd.f32 %v545, %v552
    %v557 = vadd.f32 %v546, %v552
    %v558 = vadd.f32 %v547, %v552
    %v559 = vadd.f32 %v548, %v552
    %v560 = vmax.f32 %v553, 0.0
    %v561 = vmax.f32 %v554, 0.0
    %v562 = vmax.f32 %v555, 0.0
    %v563 = vmax.f32 %v556, 0.0
    %v564 = vmax.f32 %v557, 0.0
    %v565 = vmax.f32 %v558, 0.0
    %v566 = vmax.f32 %v559, 0.0
    %v567 = vpack.c.bf16 %v561, %v560
    %v568 = vpack.c.bf16 %v563, %v562
    %v569 = vpack.c.bf16 %v565, %v564
    %v570 = vpack.c.bf16 %v566, %v566
    %v575 = vunpack.c.l.b16 %v567
    %v576 = vunpack.c.h.b16 %v567
    %v577 = vunpack.c.l.b16 %v568
    %v578 = vunpack.c.h.b16 %v568
    %v579 = vunpack.c.l.b16 %v569
    %v580 = vunpack.c.h.b16 %v569
    %v581 = vunpack.c.l.b16 %v570
    %v582 = vpack.c.b16 %v575, %v575
    %v583 = vpack.c.b16 %v576, %v576
    %v584 = vpack.c.b16 %v577, %v577
    %v585 = vpack.c.b16 %v578, %v578
    %v586 = vpack.c.b16 %v579, %v579
    %v587 = vpack.c.b16 %v580, %v580
    %v588 = vpack.c.b16 %v581, %v581
    %vm596 = vcmask 519168
    %597 = vst.msk [vmem:[%s4] sm:$0xf] %vm596, %v582
    %598 = vst.msk [vmem:[%s4 + $0x4] sm:$0xf] %vm596, %v583
    %599 = vst.msk [vmem:[%s4 + $0x8] sm:$0xf] %vm596, %v584
    %600 = vst.msk [vmem:[%s4 + $0xc] sm:$0xf] %vm596, %v585
    %601 = vst.msk [vmem:[%s4 + $0x10] sm:$0xf] %vm596, %v586
    %602 = vst.msk [vmem:[%s4 + $0x14] sm:$0xf] %vm596, %v587
    %vm603 = vcmask 518144
    %604 = vst.msk [vmem:[%s4 + $0x18] sm:$0x7] %vm603, %v588
    // Predicated region
    $region22: #{conv_generator_forward.5} parent=1 // pred_check
      _
    $region23: #{conv_generator_forward.5} parent=1 // pred_check_branch
      %606 = sbr.rel (0) target = $region25
    $region24: #{conv_generator_forward.5} parent=1 // pred_region
      _
    $region25: #{conv_generator_forward.5} parent=1 // pred_fallthru
      _
    // Predicated region
    $region26: #{conv_generator_forward.5} parent=1 // pred_check
      _
    $region27: #{conv_generator_forward.5} parent=1 // pred_check_branch
      %608 = sbr.rel (0) target = $region29
    $region28: #{conv_generator_forward.5} parent=1 // pred_region
      _
    $region29: #{conv_generator_forward.5} parent=1 // pred_fallthru
      _
    %609 = vsyncpa [#allocation3], 1

// kernel: conv_generator_forward.6
$region0: #{conv_generator_forward.6}
  #allocation0 [shape = 'u32[]', space=smem, size = 0x4, offset = 0x4, fixed_abs, tag = 'smem constant byte address 0x4 - core index']
  #allocation1 [shape = 'u32[144,128]{1,0:T(1,128)}', space=vmem, size = 0x12000, scoped, tag = 'internal scratch']
  %s0 = inlined_call_operand.vmem [shape: bf16[250,64], index: 0, kind: input, shape index: {}]
  %s1 = inlined_call_operand.vmem [shape: bf16[64,32], index: 1, kind: input, shape index: {}]
  %s2 = inlined_call_operand.hbm [shape: f32[250,8], index: 2, kind: input, shape index: {}]
  %s3 = inlined_call_operand.vmem [shape: f32[42,32], index: 3, kind: input, shape index: {}]
  %s4 = inlined_call_operand.vmem [shape: bf16[250,32], index: 4, kind: output, shape index: {}]
  %s5 = sld [smem:[#allocation0]]
  $region30: #{conv_generator_forward.6} parent=0
    _
  %s7 = ssub.s32 1, %s5
  %s8 = scalar_select 0, %s7, %s5
  $region1: #{conv_generator_forward.6} parent=0
    #allocation2 [shape = 'u8[131072]{0}', space=vmem, size = 0x20000, scoped, tag = 'input window, operand 2, single buffered']
    #allocation3 [shape = 's32[1]{0}', space=sflag, size = 0x4, scoped, tag = 'scoped memory for conv_generator_forward.6']
    %9 = vsyncpa [#allocation3], 0
    // Predicated region
    $region2: #{conv_generator_forward.6} parent=1 // pred_check
      _
    $region3: #{conv_generator_forward.6} parent=1 // pred_check_branch
      %11 = sbr.rel (0) target = $region5
    $region4: #{conv_generator_forward.6} parent=1 // pred_region
      _
    $region5: #{conv_generator_forward.6} parent=1 // pred_fallthru
      _
    // Predicated region
    $region6: #{conv_generator_forward.6} parent=1 // pred_check
      _
    $region7: #{conv_generator_forward.6} parent=1 // pred_check_branch
      %13 = sbr.rel (0) target = $region9
    $region8: #{conv_generator_forward.6} parent=1 // pred_region
      _
    $region9: #{conv_generator_forward.6} parent=1 // pred_fallthru
      _
    // Predicated region
    $region10: #{conv_generator_forward.6} parent=1 // pred_check
      _
    $region11: #{conv_generator_forward.6} parent=1 // pred_check_branch
      %15 = sbr.rel (0) target = $region13
    $region12: #{conv_generator_forward.6} parent=1 // pred_region
      %s17 = ssub.s32 4096, 4096
      %18 = vsyncadd [#allocation3], %s17
      %s19 = sshll.u32 [#allocation2], 4
      %s20 = int_to_ptr.vmem [resolvable:$true] %s19
      %25 = dma.hbm_to_vmem [thread:$0]  %s2, 4096, %s20, [#allocation3], 128, 128, 8
    $region13: #{conv_generator_forward.6} parent=1 // pred_fallthru
      _
    // Predicated region
    $region14: #{conv_generator_forward.6} parent=1 // pred_check
      _
    $region15: #{conv_generator_forward.6} parent=1 // pred_check_branch
      %27 = sbr.rel (0) target = $region17
    $region16: #{conv_generator_forward.6} parent=1 // pred_region
      _
    $region17: #{conv_generator_forward.6} parent=1 // pred_fallthru
      _
    // Predicated region
    $region18: #{conv_generator_forward.6} parent=1 // pred_check
      _
    $region19: #{conv_generator_forward.6} parent=1 // pred_check_branch
      %29 = sbr.rel (0) target = $region21
    $region20: #{conv_generator_forward.6} parent=1 // pred_region
      %30 = dma.done [#allocation3], 4096
    $region21: #{conv_generator_forward.6} parent=1 // pred_fallthru
      _
    %v32 = vld [vmem:[%s0] sm:$0xf]
    %v33 = vld [vmem:[%s0 + $0x4] sm:$0xf]
    %v34 = vld [vmem:[%s0 + $0x8] sm:$0xf]
    %v35 = vld [vmem:[%s0 + $0xc] sm:$0xf]
    %v36 = vld [vmem:[%s0 + $0x10] sm:$0xf]
    %v37 = vld [vmem:[%s0 + $0x14] sm:$0xf]
    %v38 = vld [vmem:[%s0 + $0x18] sm:$0xf]
    %v39 = vld [vmem:[%s0 + $0x1c] sm:$0xf]
    %v40 = vld [vmem:[%s0 + $0x20] sm:$0xf]
    %v41 = vld [vmem:[%s0 + $0x24] sm:$0xf]
    %v42 = vld [vmem:[%s0 + $0x28] sm:$0xf]
    %v43 = vld [vmem:[%s0 + $0x2c] sm:$0xf]
    %v44 = vld [vmem:[%s0 + $0x30] sm:$0xf]
    %v45 = vld [vmem:[%s0 + $0x34] sm:$0xf]
    %v46 = vld [vmem:[%s0 + $0x38] sm:$0xf]
    %v47 = vld [vmem:[%s0 + $0x3c] sm:$0xf]
    %v48 = vld [vmem:[%s0 + $0x40] sm:$0xf]
    %v49 = vld [vmem:[%s0 + $0x44] sm:$0xf]
    %v50 = vld [vmem:[%s0 + $0x48] sm:$0xf]
    %v51 = vld [vmem:[%s0 + $0x4c] sm:$0xf]
    %v52 = vld [vmem:[%s0 + $0x50] sm:$0xf]
    %v53 = vld [vmem:[%s0 + $0x54] sm:$0xf]
    %v54 = vld [vmem:[%s0 + $0x58] sm:$0xf]
    %v55 = vld [vmem:[%s0 + $0x5c] sm:$0xf]
    %v56 = vld [vmem:[%s0 + $0x60] sm:$0xf]
    %v57 = vld [vmem:[%s0 + $0x64] sm:$0xf]
    %v58 = vld [vmem:[%s0 + $0x68] sm:$0xf]
    %v59 = vld [vmem:[%s0 + $0x6c] sm:$0xf]
    %v60 = vld [vmem:[%s0 + $0x70] sm:$0xf]
    %v61 = vld [vmem:[%s0 + $0x74] sm:$0xf]
    %v62 = vld [vmem:[%s0 + $0x78] sm:$0xf]
    %v63 = vld [vmem:[%s0 + $0x7c] sm:$0x1]
    %v64 = vld [vmem:[%s1] sm:$0xf]
    %v65 = vld [vmem:[%s1 + $0x4] sm:$0xf]
    %v66 = vld [vmem:[%s1 + $0x8] sm:$0xf]
    %v67 = vld [vmem:[%s1 + $0xc] sm:$0xf]
    %v68 = vld [vmem:[%s1 + $0x10] sm:$0xf]
    %v69 = vld [vmem:[%s1 + $0x14] sm:$0xf]
    %v70 = vld [vmem:[%s1 + $0x18] sm:$0xf]
    %v71 = vld [vmem:[%s1 + $0x1c] sm:$0xf]
    %v104 = vunpack.c.l.b16 %v32
    %v105 = vunpack.c.l.b16 %v33
    %v106 = vunpack.c.l.b16 %v34
    %v107 = vunpack.c.l.b16 %v35
    %v108 = vunpack.c.l.b16 %v36
    %v109 = vunpack.c.l.b16 %v37
    %v110 = vunpack.c.l.b16 %v38
    %v111 = vunpack.c.l.b16 %v39
    %v112 = vunpack.c.l.b16 %v40
    %v113 = vunpack.c.l.b16 %v41
    %v114 = vunpack.c.l.b16 %v42
    %v115 = vunpack.c.l.b16 %v43
    %v116 = vunpack.c.l.b16 %v44
    %v117 = vunpack.c.l.b16 %v45
    %v118 = vunpack.c.l.b16 %v46
    %v119 = vunpack.c.l.b16 %v47
    %v120 = vunpack.c.l.b16 %v48
    %v121 = vunpack.c.l.b16 %v49
    %v122 = vunpack.c.l.b16 %v50
    %v123 = vunpack.c.l.b16 %v51
    %v124 = vunpack.c.l.b16 %v52
    %v125 = vunpack.c.l.b16 %v53
    %v126 = vunpack.c.l.b16 %v54
    %v127 = vunpack.c.l.b16 %v55
    %v128 = vunpack.c.l.b16 %v56
    %v129 = vunpack.c.l.b16 %v57
    %v130 = vunpack.c.l.b16 %v58
    %v131 = vunpack.c.l.b16 %v59
    %v132 = vunpack.c.l.b16 %v60
    %v133 = vunpack.c.l.b16 %v61
    %v134 = vunpack.c.l.b16 %v62
    %v135 = vunpack.c.l.b16 %v63
    %v136 = vpack.c.b16 %v105, %v104
    %v137 = vpack.c.b16 %v107, %v106
    %v138 = vpack.c.b16 %v109, %v108
    %v139 = vpack.c.b16 %v111, %v110
    %v140 = vpack.c.b16 %v113, %v112
    %v141 = vpack.c.b16 %v115, %v114
    %v142 = vpack.c.b16 %v117, %v116
    %v143 = vpack.c.b16 %v119, %v118
    %v144 = vpack.c.b16 %v121, %v120
    %v145 = vpack.c.b16 %v123, %v122
    %v146 = vpack.c.b16 %v125, %v124
    %v147 = vpack.c.b16 %v127, %v126
    %v148 = vpack.c.b16 %v129, %v128
    %v149 = vpack.c.b16 %v131, %v130
    %v150 = vpack.c.b16 %v133, %v132
    %v151 = vpack.c.b16 %v135, %v134
    %v160 = vunpack.c.l.b16 %v64
    %v161 = vunpack.c.l.b16 %v65
    %v162 = vunpack.c.l.b16 %v66
    %v163 = vunpack.c.l.b16 %v67
    %v164 = vunpack.c.l.b16 %v68
    %v165 = vunpack.c.l.b16 %v69
    %v166 = vunpack.c.l.b16 %v70
    %v167 = vunpack.c.l.b16 %v71
    %v168 = vpack.c.b16 %v161, %v160
    %v169 = vpack.c.b16 %v163, %v162
    %v170 = vpack.c.b16 %v165, %v164
    %v171 = vpack.c.b16 %v167, %v166
    %vm176 = vcmask 523264
    %v178 = vsel %vm176, %v136, 0
    %v181 = vsel %vm176, %v137, 0
    %v184 = vsel %vm176, %v138, 0
    %v187 = vsel %vm176, %v139, 0
    %v190 = vsel %vm176, %v140, 0
    %v193 = vsel %vm176, %v141, 0
    %v196 = vsel %vm176, %v142, 0
    %v199 = vsel %vm176, %v143, 0
    %v202 = vsel %vm176, %v144, 0
    %v205 = vsel %vm176, %v145, 0
    %v208 = vsel %vm176, %v146, 0
    %v211 = vsel %vm176, %v147, 0
    %v214 = vsel %vm176, %v148, 0
    %v217 = vsel %vm176, %v149, 0
    %v220 = vsel %vm176, %v150, 0
    %v223 = vsel %vm176, %v151, 0
    %225 = vmatprep.subr.bf16.mxu0 0
    %226 = vmatpush1.bf16.msra.mxu0 0
    %227 = vmatprep.subr.bf16.mxu0 0
    %228 = vmatpush1.bf16.msra.mxu0 0
    %229 = vmatprep.subr.bf16.mxu0 0
    %230 = vmatpush1.bf16.msra.mxu0 0
    %231 = vmatprep.subr.bf16.mxu0 0
    %232 = vmatpush1.bf16.msra.mxu0 0
    %233 = vmatprep.subr.bf16.mxu0 0
    %234 = vmatpush1.bf16.msra.mxu0 %v171
    %235 = vmatprep.subr.bf16.mxu0 0
    %236 = vmatpush1.bf16.msra.mxu0 %v170
    %237 = vmatprep.subr.bf16.mxu0 0
    %238 = vmatpush1.bf16.msra.mxu0 %v169
    %239 = vmatprep.subr.bf16.mxu0 0
    %240 = vmatpush1.bf16.msra.mxu0 %v168
    %241 = vmatprep.subr.bf16.mxu0 0
    %242 = vmatpush2.bf16.msra.mxu0 0
    %243 = vmatprep.subr.bf16.mxu0 0
    %244 = vmatpush2.bf16.msra.mxu0 0
    %245 = vmatprep.subr.bf16.mxu0 0
    %246 = vmatpush2.bf16.msra.mxu0 0
    %247 = vmatprep.subr.bf16.mxu0 0
    %248 = vmatpush2.bf16.msra.mxu0 0
    %249 = vmatprep.subr.bf16.mxu0 0
    %250 = vmatpush2.bf16.msra.mxu0 0
    %251 = vmatprep.subr.bf16.mxu0 0
    %252 = vmatpush2.bf16.msra.mxu0 0
    %253 = vmatprep.subr.bf16.mxu0 0
    %254 = vmatpush2.bf16.msra.mxu0 0
    %255 = vmatprep.subr.bf16.mxu0 0
    %256 = vmatpush2.bf16.msra.mxu0 0
    %257 = vmatprep.mubr.bf16.mxu0 0
    %258 = vmatmul.mubr.bf16.gmra.mxu0 %v178
    %v259 = vpop.f32.mrf.mxu0
    %v260 = vadd.f32 0.0, %v259
    %v261 = vpop.f32.mrf.mxu0
    %v262 = vpop.f32.mrf.mxu0
    %v263 = vadd.f32 0.0, %v262
    %v264 = vpop.f32.mrf.mxu0
    %265 = vmatprep.mubr.bf16.mxu0 0
    %266 = vmatmul.mubr.bf16.gmra.mxu0 %v181
    %v267 = vpop.f32.mrf.mxu0
    %v268 = vadd.f32 0.0, %v267
    %v269 = vpop.f32.mrf.mxu0
    %v270 = vpop.f32.mrf.mxu0
    %v271 = vadd.f32 0.0, %v270
    %v272 = vpop.f32.mrf.mxu0
    %273 = vmatprep.mubr.bf16.mxu0 0
    %274 = vmatmul.mubr.bf16.gmra.mxu0 %v184
    %v275 = vpop.f32.mrf.mxu0
    %v276 = vadd.f32 0.0, %v275
    %v277 = vpop.f32.mrf.mxu0
    %v278 = vpop.f32.mrf.mxu0
    %v279 = vadd.f32 0.0, %v278
    %v280 = vpop.f32.mrf.mxu0
    %281 = vmatprep.mubr.bf16.mxu0 0
    %282 = vmatmul.mubr.bf16.gmra.mxu0 %v187
    %v283 = vpop.f32.mrf.mxu0
    %v284 = vadd.f32 0.0, %v283
    %v285 = vpop.f32.mrf.mxu0
    %v286 = vpop.f32.mrf.mxu0
    %v287 = vadd.f32 0.0, %v286
    %v288 = vpop.f32.mrf.mxu0
    %289 = vmatprep.mubr.bf16.mxu0 0
    %290 = vmatmul.mubr.bf16.gmra.mxu0 %v190
    %v291 = vpop.f32.mrf.mxu0
    %v292 = vadd.f32 0.0, %v291
    %v293 = vpop.f32.mrf.mxu0
    %v294 = vpop.f32.mrf.mxu0
    %v295 = vadd.f32 0.0, %v294
    %v296 = vpop.f32.mrf.mxu0
    %297 = vmatprep.mubr.bf16.mxu0 0
    %298 = vmatmul.mubr.bf16.gmra.mxu0 %v193
    %v299 = vpop.f32.mrf.mxu0
    %v300 = vadd.f32 0.0, %v299
    %v301 = vpop.f32.mrf.mxu0
    %v302 = vpop.f32.mrf.mxu0
    %v303 = vadd.f32 0.0, %v302
    %v304 = vpop.f32.mrf.mxu0
    %305 = vmatprep.mubr.bf16.mxu0 0
    %306 = vmatmul.mubr.bf16.gmra.mxu0 %v196
    %v307 = vpop.f32.mrf.mxu0
    %v308 = vadd.f32 0.0, %v307
    %v309 = vpop.f32.mrf.mxu0
    %v310 = vpop.f32.mrf.mxu0
    %v311 = vadd.f32 0.0, %v310
    %v312 = vpop.f32.mrf.mxu0
    %313 = vmatprep.mubr.bf16.mxu0 0
    %314 = vmatmul.mubr.bf16.gmra.mxu0 %v199
    %v315 = vpop.f32.mrf.mxu0
    %v316 = vadd.f32 0.0, %v315
    %v317 = vpop.f32.mrf.mxu0
    %v318 = vpop.f32.mrf.mxu0
    %v319 = vadd.f32 0.0, %v318
    %v320 = vpop.f32.mrf.mxu0
    %321 = vmatprep.mubr.bf16.mxu0 0
    %322 = vmatmul.mubr.bf16.gmra.mxu0 %v202
    %v323 = vpop.f32.mrf.mxu0
    %v324 = vadd.f32 0.0, %v323
    %v325 = vpop.f32.mrf.mxu0
    %v326 = vpop.f32.mrf.mxu0
    %v327 = vadd.f32 0.0, %v326
    %v328 = vpop.f32.mrf.mxu0
    %329 = vmatprep.mubr.bf16.mxu0 0
    %330 = vmatmul.mubr.bf16.gmra.mxu0 %v205
    %v331 = vpop.f32.mrf.mxu0
    %v332 = vadd.f32 0.0, %v331
    %v333 = vpop.f32.mrf.mxu0
    %v334 = vpop.f32.mrf.mxu0
    %v335 = vadd.f32 0.0, %v334
    %v336 = vpop.f32.mrf.mxu0
    %337 = vmatprep.mubr.bf16.mxu0 0
    %338 = vmatmul.mubr.bf16.gmra.mxu0 %v208
    %v339 = vpop.f32.mrf.mxu0
    %v340 = vadd.f32 0.0, %v339
    %v341 = vpop.f32.mrf.mxu0
    %v342 = vpop.f32.mrf.mxu0
    %v343 = vadd.f32 0.0, %v342
    %v344 = vpop.f32.mrf.mxu0
    %345 = vmatprep.mubr.bf16.mxu0 0
    %346 = vmatmul.mubr.bf16.gmra.mxu0 %v211
    %v347 = vpop.f32.mrf.mxu0
    %v348 = vadd.f32 0.0, %v347
    %v349 = vpop.f32.mrf.mxu0
    %v350 = vpop.f32.mrf.mxu0
    %v351 = vadd.f32 0.0, %v350
    %v352 = vpop.f32.mrf.mxu0
    %353 = vmatprep.mubr.bf16.mxu0 0
    %354 = vmatmul.mubr.bf16.gmra.mxu0 %v214
    %v355 = vpop.f32.mrf.mxu0
    %v356 = vadd.f32 0.0, %v355
    %v357 = vpop.f32.mrf.mxu0
    %v358 = vpop.f32.mrf.mxu0
    %v359 = vadd.f32 0.0, %v358
    %v360 = vpop.f32.mrf.mxu0
    %361 = vmatprep.mubr.bf16.mxu0 0
    %362 = vmatmul.mubr.bf16.gmra.mxu0 %v217
    %v363 = vpop.f32.mrf.mxu0
    %v364 = vadd.f32 0.0, %v363
    %v365 = vpop.f32.mrf.mxu0
    %v366 = vpop.f32.mrf.mxu0
    %v367 = vadd.f32 0.0, %v366
    %v368 = vpop.f32.mrf.mxu0
    %369 = vmatprep.mubr.bf16.mxu0 0
    %370 = vmatmul.mubr.bf16.gmra.mxu0 %v220
    %v371 = vpop.f32.mrf.mxu0
    %v372 = vadd.f32 0.0, %v371
    %v373 = vpop.f32.mrf.mxu0
    %v374 = vpop.f32.mrf.mxu0
    %v375 = vadd.f32 0.0, %v374
    %v376 = vpop.f32.mrf.mxu0
    %377 = vmatprep.mubr.bf16.mxu0 0
    %378 = vmatmul.mubr.bf16.gmra.mxu0 %v223
    %v379 = vpop.f32.mrf.mxu0
    %v380 = vadd.f32 0.0, %v379
    %v381 = vpop.f32.mrf.mxu0
    %v382 = vpop.f32.mrf.mxu0
    %v383 = vadd.f32 0.0, %v382
    %v384 = vpop.f32.mrf.mxu0
    %385 = vdwg.mxu0
    %v386 = vld [vmem:[#allocation2] sm:$0xff]
    %v387 = vld [vmem:[#allocation2 + $0x8] sm:$0xff]
    %v388 = vld [vmem:[#allocation2 + $0x10] sm:$0xff]
    %v389 = vld [vmem:[#allocation2 + $0x18] sm:$0xff]
    %v390 = vld [vmem:[#allocation2 + $0x20] sm:$0xff]
    %v391 = vld [vmem:[#allocation2 + $0x28] sm:$0xff]
    %v392 = vld [vmem:[#allocation2 + $0x30] sm:$0xff]
    %v393 = vld [vmem:[#allocation2 + $0x38] sm:$0xff]
    %v394 = vld [vmem:[#allocation2 + $0x40] sm:$0xff]
    %v395 = vld [vmem:[#allocation2 + $0x48] sm:$0xff]
    %v396 = vld [vmem:[#allocation2 + $0x50] sm:$0xff]
    %v397 = vld [vmem:[#allocation2 + $0x58] sm:$0xff]
    %v398 = vld [vmem:[#allocation2 + $0x60] sm:$0xff]
    %v399 = vld [vmem:[#allocation2 + $0x68] sm:$0xff]
    %v400 = vld [vmem:[#allocation2 + $0x70] sm:$0xff]
    %v401 = vld [vmem:[#allocation2 + $0x78] sm:$0xff]
    %v402 = vld [vmem:[#allocation2 + $0x80] sm:$0xff]
    %v403 = vld [vmem:[#allocation2 + $0x88] sm:$0xff]
    %v404 = vld [vmem:[#allocation2 + $0x90] sm:$0xff]
    %v405 = vld [vmem:[#allocation2 + $0x98] sm:$0xff]
    %v406 = vld [vmem:[#allocation2 + $0xa0] sm:$0xff]
    %v407 = vld [vmem:[#allocation2 + $0xa8] sm:$0xff]
    %v408 = vld [vmem:[#allocation2 + $0xb0] sm:$0xff]
    %v409 = vld [vmem:[#allocation2 + $0xb8] sm:$0xff]
    %v410 = vld [vmem:[#allocation2 + $0xc0] sm:$0xff]
    %v411 = vld [vmem:[#allocation2 + $0xc8] sm:$0xff]
    %v412 = vld [vmem:[#allocation2 + $0xd0] sm:$0xff]
    %v413 = vld [vmem:[#allocation2 + $0xd8] sm:$0xff]
    %v414 = vld [vmem:[#allocation2 + $0xe0] sm:$0xff]
    %v415 = vld [vmem:[#allocation2 + $0xe8] sm:$0xff]
    %v416 = vld [vmem:[#allocation2 + $0xf0] sm:$0xff]
    %v417 = vld [vmem:[#allocation2 + $0xf8] sm:$0x3]
    %v418 = vld [vmem:[%s3] sm:$0xff]
    %vm419 = vcmask 64512
    %v421 = vsel %vm419, %v386, 0
    %v424 = vsel %vm419, %v387, 0
    %v427 = vsel %vm419, %v388, 0
    %v430 = vsel %vm419, %v389, 0
    %v433 = vsel %vm419, %v390, 0
    %v436 = vsel %vm419, %v391, 0
    %v439 = vsel %vm419, %v392, 0
    %v442 = vsel %vm419, %v393, 0
    %v445 = vsel %vm419, %v394, 0
    %v448 = vsel %vm419, %v395, 0
    %v451 = vsel %vm419, %v396, 0
    %v454 = vsel %vm419, %v397, 0
    %v457 = vsel %vm419, %v398, 0
    %v460 = vsel %vm419, %v399, 0
    %v463 = vsel %vm419, %v400, 0
    %v466 = vsel %vm419, %v401, 0
    %v469 = vsel %vm419, %v402, 0
    %v472 = vsel %vm419, %v403, 0
    %v475 = vsel %vm419, %v404, 0
    %v478 = vsel %vm419, %v405, 0
    %v481 = vsel %vm419, %v406, 0
    %v484 = vsel %vm419, %v407, 0
    %v487 = vsel %vm419, %v408, 0
    %v490 = vsel %vm419, %v409, 0
    %v493 = vsel %vm419, %v410, 0
    %v496 = vsel %vm419, %v411, 0
    %v499 = vsel %vm419, %v412, 0
    %v502 = vsel %vm419, %v413, 0
    %v505 = vsel %vm419, %v414, 0
    %v508 = vsel %vm419, %v415, 0
    %v511 = vsel %vm419, %v416, 0
    %v514 = vsel %vm419, %v417, 0
    %516 = vmatprep.subr.mxu0 0.0
    %517 = vmatpush1.msra.mxu0 0.0
    %518 = vmatprep.subr.mxu0 0.0
    %519 = vmatpush1.msra.mxu0 0.0
    %520 = vmatprep.subr.mxu0 0.0
    %521 = vmatpush1.msra.mxu0 0.0
    %522 = vmatprep.subr.mxu0 0.0
    %523 = vmatpush1.msra.mxu0 0.0
    %524 = vmatprep.subr.mxu0 0.0
    %525 = vmatpush1.msra.mxu0 0.0
    %526 = vmatprep.subr.mxu0 0.0
    %527 = vmatpush1.msra.mxu0 0.0
    %528 = vmatprep.subr.mxu0 0.0
    %529 = vmatpush1.msra.mxu0 0.0
    %530 = vmatprep.subr.mxu0 0.0
    %531 = vmatpush1.msra.mxu0 0.0
    %532 = vmatprep.subr.mxu0 0.0
    %533 = vmatpush1.msra.mxu0 0.0
    %534 = vmatprep.subr.mxu0 0.0
    %535 = vmatpush1.msra.mxu0 0.0
    %536 = vmatprep.subr.mxu0 0.0
    %537 = vmatpush1.msra.mxu0 0.0
    %538 = vmatprep.subr.mxu0 0.0
    %539 = vmatpush1.msra.mxu0 0.0
    %540 = vmatprep.subr.mxu0 0.0
    %541 = vmatpush1.msra.mxu0 0.0
    %542 = vmatprep.subr.mxu0 0.0
    %543 = vmatpush1.msra.mxu0 0.0
    %544 = vmatprep.subr.mxu0 0.0
    %545 = vmatpush1.msra.mxu0 0.0
    %546 = vmatprep.subr.mxu0 0.0
    %547 = vmatpush1.msra.mxu0 %v418
    %548 = vmatprep.subr.mxu0 0.0
    %549 = vmatpush2.msra.mxu0 0.0
    %550 = vmatprep.subr.mxu0 0.0
    %551 = vmatpush2.msra.mxu0 0.0
    %552 = vmatprep.subr.mxu0 0.0
    %553 = vmatpush2.msra.mxu0 0.0
    %554 = vmatprep.subr.mxu0 0.0
    %555 = vmatpush2.msra.mxu0 0.0
    %556 = vmatprep.subr.mxu0 0.0
    %557 = vmatpush2.msra.mxu0 0.0
    %558 = vmatprep.subr.mxu0 0.0
    %559 = vmatpush2.msra.mxu0 0.0
    %560 = vmatprep.subr.mxu0 0.0
    %561 = vmatpush2.msra.mxu0 0.0
    %562 = vmatprep.subr.mxu0 0.0
    %563 = vmatpush2.msra.mxu0 0.0
    %564 = vmatprep.subr.mxu0 0.0
    %565 = vmatpush2.msra.mxu0 0.0
    %566 = vmatprep.subr.mxu0 0.0
    %567 = vmatpush2.msra.mxu0 0.0
    %568 = vmatprep.subr.mxu0 0.0
    %569 = vmatpush2.msra.mxu0 0.0
    %570 = vmatprep.subr.mxu0 0.0
    %571 = vmatpush2.msra.mxu0 0.0
    %572 = vmatprep.subr.mxu0 0.0
    %573 = vmatpush2.msra.mxu0 0.0
    %574 = vmatprep.subr.mxu0 0.0
    %575 = vmatpush2.msra.mxu0 0.0
    %576 = vmatprep.subr.mxu0 0.0
    %577 = vmatpush2.msra.mxu0 0.0
    %578 = vmatprep.subr.mxu0 0.0
    %579 = vmatpush2.msra.mxu0 0.0
    %580 = vmatprep.mubr.f32.mxu0 0.0
    %581 = vmatmul.mubr.f32.gmra.mxu0 %v421
    %v582 = vpop.f32.mrf.mxu0
    %v583 = vadd.f32 0.0, %v582
    %v584 = vpop.f32.mrf.mxu0
    %585 = vmatprep.mubr.f32.mxu0 0.0
    %586 = vmatmul.mubr.f32.gmra.mxu0 %v424
    %v587 = vpop.f32.mrf.mxu0
    %v588 = vadd.f32 0.0, %v587
    %v589 = vpop.f32.mrf.mxu0
    %590 = vmatprep.mubr.f32.mxu0 0.0
    %591 = vmatmul.mubr.f32.gmra.mxu0 %v427
    %v592 = vpop.f32.mrf.mxu0
    %v593 = vadd.f32 0.0, %v592
    %v594 = vpop.f32.mrf.mxu0
    %595 = vmatprep.mubr.f32.mxu0 0.0
    %596 = vmatmul.mubr.f32.gmra.mxu0 %v430
    %v597 = vpop.f32.mrf.mxu0
    %v598 = vadd.f32 0.0, %v597
    %v599 = vpop.f32.mrf.mxu0
    %600 = vmatprep.mubr.f32.mxu0 0.0
    %601 = vmatmul.mubr.f32.gmra.mxu0 %v433
    %v602 = vpop.f32.mrf.mxu0
    %v603 = vadd.f32 0.0, %v602
    %v604 = vpop.f32.mrf.mxu0
    %605 = vmatprep.mubr.f32.mxu0 0.0
    %606 = vmatmul.mubr.f32.gmra.mxu0 %v436
    %v607 = vpop.f32.mrf.mxu0
    %v608 = vadd.f32 0.0, %v607
    %v609 = vpop.f32.mrf.mxu0
    %610 = vmatprep.mubr.f32.mxu0 0.0
    %611 = vmatmul.mubr.f32.gmra.mxu0 %v439
    %v612 = vpop.f32.mrf.mxu0
    %v613 = vadd.f32 0.0, %v612
    %v614 = vpop.f32.mrf.mxu0
    %615 = vmatprep.mubr.f32.mxu0 0.0
    %616 = vmatmul.mubr.f32.gmra.mxu0 %v442
    %v617 = vpop.f32.mrf.mxu0
    %v618 = vadd.f32 0.0, %v617
    %v619 = vpop.f32.mrf.mxu0
    %620 = vmatprep.mubr.f32.mxu0 0.0
    %621 = vmatmul.mubr.f32.gmra.mxu0 %v445
    %v622 = vpop.f32.mrf.mxu0
    %v623 = vadd.f32 0.0, %v622
    %v624 = vpop.f32.mrf.mxu0
    %625 = vmatprep.mubr.f32.mxu0 0.0
    %626 = vmatmul.mubr.f32.gmra.mxu0 %v448
    %v627 = vpop.f32.mrf.mxu0
    %v628 = vadd.f32 0.0, %v627
    %v629 = vpop.f32.mrf.mxu0
    %630 = vmatprep.mubr.f32.mxu0 0.0
    %631 = vmatmul.mubr.f32.gmra.mxu0 %v451
    %v632 = vpop.f32.mrf.mxu0
    %v633 = vadd.f32 0.0, %v632
    %v634 = vpop.f32.mrf.mxu0
    %635 = vmatprep.mubr.f32.mxu0 0.0
    %636 = vmatmul.mubr.f32.gmra.mxu0 %v454
    %v637 = vpop.f32.mrf.mxu0
    %v638 = vadd.f32 0.0, %v637
    %v639 = vpop.f32.mrf.mxu0
    %640 = vmatprep.mubr.f32.mxu0 0.0
    %641 = vmatmul.mubr.f32.gmra.mxu0 %v457
    %v642 = vpop.f32.mrf.mxu0
    %v643 = vadd.f32 0.0, %v642
    %v644 = vpop.f32.mrf.mxu0
    %645 = vmatprep.mubr.f32.mxu0 0.0
    %646 = vmatmul.mubr.f32.gmra.mxu0 %v460
    %v647 = vpop.f32.mrf.mxu0
    %v648 = vadd.f32 0.0, %v647
    %v649 = vpop.f32.mrf.mxu0
    %650 = vmatprep.mubr.f32.mxu0 0.0
    %651 = vmatmul.mubr.f32.gmra.mxu0 %v463
    %v652 = vpop.f32.mrf.mxu0
    %v653 = vadd.f32 0.0, %v652
    %v654 = vpop.f32.mrf.mxu0
    %655 = vmatprep.mubr.f32.mxu0 0.0
    %656 = vmatmul.mubr.f32.gmra.mxu0 %v466
    %v657 = vpop.f32.mrf.mxu0
    %v658 = vadd.f32 0.0, %v657
    %v659 = vpop.f32.mrf.mxu0
    %660 = vmatprep.mubr.f32.mxu0 0.0
    %661 = vmatmul.mubr.f32.gmra.mxu0 %v469
    %v662 = vpop.f32.mrf.mxu0
    %v663 = vadd.f32 0.0, %v662
    %v664 = vpop.f32.mrf.mxu0
    %665 = vmatprep.mubr.f32.mxu0 0.0
    %666 = vmatmul.mubr.f32.gmra.mxu0 %v472
    %v667 = vpop.f32.mrf.mxu0
    %v668 = vadd.f32 0.0, %v667
    %v669 = vpop.f32.mrf.mxu0
    %670 = vmatprep.mubr.f32.mxu0 0.0
    %671 = vmatmul.mubr.f32.gmra.mxu0 %v475
    %v672 = vpop.f32.mrf.mxu0
    %v673 = vadd.f32 0.0, %v672
    %v674 = vpop.f32.mrf.mxu0
    %675 = vmatprep.mubr.f32.mxu0 0.0
    %676 = vmatmul.mubr.f32.gmra.mxu0 %v478
    %v677 = vpop.f32.mrf.mxu0
    %v678 = vadd.f32 0.0, %v677
    %v679 = vpop.f32.mrf.mxu0
    %680 = vmatprep.mubr.f32.mxu0 0.0
    %681 = vmatmul.mubr.f32.gmra.mxu0 %v481
    %v682 = vpop.f32.mrf.mxu0
    %v683 = vadd.f32 0.0, %v682
    %v684 = vpop.f32.mrf.mxu0
    %685 = vmatprep.mubr.f32.mxu0 0.0
    %686 = vmatmul.mubr.f32.gmra.mxu0 %v484
    %v687 = vpop.f32.mrf.mxu0
    %v688 = vadd.f32 0.0, %v687
    %v689 = vpop.f32.mrf.mxu0
    %690 = vmatprep.mubr.f32.mxu0 0.0
    %691 = vmatmul.mubr.f32.gmra.mxu0 %v487
    %v692 = vpop.f32.mrf.mxu0
    %v693 = vadd.f32 0.0, %v692
    %v694 = vpop.f32.mrf.mxu0
    %695 = vmatprep.mubr.f32.mxu0 0.0
    %696 = vmatmul.mubr.f32.gmra.mxu0 %v490
    %v697 = vpop.f32.mrf.mxu0
    %v698 = vadd.f32 0.0, %v697
    %v699 = vpop.f32.mrf.mxu0
    %700 = vmatprep.mubr.f32.mxu0 0.0
    %701 = vmatmul.mubr.f32.gmra.mxu0 %v493
    %v702 = vpop.f32.mrf.mxu0
    %v703 = vadd.f32 0.0, %v702
    %v704 = vpop.f32.mrf.mxu0
    %705 = vmatprep.mubr.f32.mxu0 0.0
    %706 = vmatmul.mubr.f32.gmra.mxu0 %v496
    %v707 = vpop.f32.mrf.mxu0
    %v708 = vadd.f32 0.0, %v707
    %v709 = vpop.f32.mrf.mxu0
    %710 = vmatprep.mubr.f32.mxu0 0.0
    %711 = vmatmul.mubr.f32.gmra.mxu0 %v499
    %v712 = vpop.f32.mrf.mxu0
    %v713 = vadd.f32 0.0, %v712
    %v714 = vpop.f32.mrf.mxu0
    %715 = vmatprep.mubr.f32.mxu0 0.0
    %716 = vmatmul.mubr.f32.gmra.mxu0 %v502
    %v717 = vpop.f32.mrf.mxu0
    %v718 = vadd.f32 0.0, %v717
    %v719 = vpop.f32.mrf.mxu0
    %720 = vmatprep.mubr.f32.mxu0 0.0
    %721 = vmatmul.mubr.f32.gmra.mxu0 %v505
    %v722 = vpop.f32.mrf.mxu0
    %v723 = vadd.f32 0.0, %v722
    %v724 = vpop.f32.mrf.mxu0
    %725 = vmatprep.mubr.f32.mxu0 0.0
    %726 = vmatmul.mubr.f32.gmra.mxu0 %v508
    %v727 = vpop.f32.mrf.mxu0
    %v728 = vadd.f32 0.0, %v727
    %v729 = vpop.f32.mrf.mxu0
    %730 = vmatprep.mubr.f32.mxu0 0.0
    %731 = vmatmul.mubr.f32.gmra.mxu0 %v511
    %v732 = vpop.f32.mrf.mxu0
    %v733 = vadd.f32 0.0, %v732
    %v734 = vpop.f32.mrf.mxu0
    %735 = vmatprep.mubr.f32.mxu0 0.0
    %736 = vmatmul.mubr.f32.gmra.mxu0 %v514
    %v737 = vpop.f32.mrf.mxu0
    %v738 = vadd.f32 0.0, %v737
    %v739 = vpop.f32.mrf.mxu0
    %740 = vdwg.mxu0
    %v741 = vmul.f32 %v260, %v583
    %v742 = vmul.f32 %v263, %v588
    %v743 = vmul.f32 %v268, %v593
    %v744 = vmul.f32 %v271, %v598
    %v745 = vmul.f32 %v276, %v603
    %v746 = vmul.f32 %v279, %v608
    %v747 = vmul.f32 %v284, %v613
    %v748 = vmul.f32 %v287, %v618
    %v749 = vmul.f32 %v292, %v623
    %v750 = vmul.f32 %v295, %v628
    %v751 = vmul.f32 %v300, %v633
    %v752 = vmul.f32 %v303, %v638
    %v753 = vmul.f32 %v308, %v643
    %v754 = vmul.f32 %v311, %v648
    %v755 = vmul.f32 %v316, %v653
    %v756 = vmul.f32 %v319, %v658
    %v757 = vmul.f32 %v324, %v663
    %v758 = vmul.f32 %v327, %v668
    %v759 = vmul.f32 %v332, %v673
    %v760 = vmul.f32 %v335, %v678
    %v761 = vmul.f32 %v340, %v683
    %v762 = vmul.f32 %v343, %v688
    %v763 = vmul.f32 %v348, %v693
    %v764 = vmul.f32 %v351, %v698
    %v765 = vmul.f32 %v356, %v703
    %v766 = vmul.f32 %v359, %v708
    %v767 = vmul.f32 %v364, %v713
    %v768 = vmul.f32 %v367, %v718
    %v769 = vmul.f32 %v372, %v723
    %v770 = vmul.f32 %v375, %v728
    %v771 = vmul.f32 %v380, %v733
    %v772 = vmul.f32 %v383, %v738
    %vm773 = vcmask 261120
    %v774 = vsel %vm773, %v741, 0.0
    %v775 = vsel %vm773, %v742, 0.0
    %v776 = vadd.f32 %v774, %v775
    %v777 = vsel %vm773, %v743, 0.0
    %v778 = vadd.f32 %v776, %v777
    %v779 = vsel %vm773, %v744, 0.0
    %v780 = vadd.f32 %v778, %v779
    %v781 = vsel %vm773, %v745, 0.0
    %v782 = vadd.f32 %v780, %v781
    %v783 = vsel %vm773, %v746, 0.0
    %v784 = vadd.f32 %v782, %v783
    %v785 = vsel %vm773, %v747, 0.0
    %v786 = vadd.f32 %v784, %v785
    %v787 = vsel %vm773, %v748, 0.0
    %v788 = vadd.f32 %v786, %v787
    %v789 = vsel %vm773, %v749, 0.0
    %v790 = vadd.f32 %v788, %v789
    %v791 = vsel %vm773, %v750, 0.0
    %v792 = vadd.f32 %v790, %v791
    %v793 = vsel %vm773, %v751, 0.0
    %v794 = vadd.f32 %v792, %v793
    %v795 = vsel %vm773, %v752, 0.0
    %v796 = vadd.f32 %v794, %v795
    %v797 = vsel %vm773, %v753, 0.0
    %v798 = vadd.f32 %v796, %v797
    %v799 = vsel %vm773, %v754, 0.0
    %v800 = vadd.f32 %v798, %v799
    %v801 = vsel %vm773, %v755, 0.0
    %v802 = vadd.f32 %v800, %v801
    %v803 = vsel %vm773, %v756, 0.0
    %v804 = vadd.f32 %v802, %v803
    %v805 = vsel %vm773, %v757, 0.0
    %v806 = vadd.f32 %v804, %v805
    %v807 = vsel %vm773, %v758, 0.0
    %v808 = vadd.f32 %v806, %v807
    %v809 = vsel %vm773, %v759, 0.0
    %v810 = vadd.f32 %v808, %v809
    %v811 = vsel %vm773, %v760, 0.0
    %v812 = vadd.f32 %v810, %v811
    %v813 = vsel %vm773, %v761, 0.0
    %v814 = vadd.f32 %v812, %v813
    %v815 = vsel %vm773, %v762, 0.0
    %v816 = vadd.f32 %v814, %v815
    %v817 = vsel %vm773, %v763, 0.0
    %v818 = vadd.f32 %v816, %v817
    %v819 = vsel %vm773, %v764, 0.0
    %v820 = vadd.f32 %v818, %v819
    %v821 = vsel %vm773, %v765, 0.0
    %v822 = vadd.f32 %v820, %v821
    %v823 = vsel %vm773, %v766, 0.0
    %v824 = vadd.f32 %v822, %v823
    %v825 = vsel %vm773, %v767, 0.0
    %v826 = vadd.f32 %v824, %v825
    %v827 = vsel %vm773, %v768, 0.0
    %v828 = vadd.f32 %v826, %v827
    %v829 = vsel %vm773, %v769, 0.0
    %v830 = vadd.f32 %v828, %v829
    %v831 = vsel %vm773, %v770, 0.0
    %v832 = vadd.f32 %v830, %v831
    %v833 = vsel %vm773, %v771, 0.0
    %v834 = vadd.f32 %v832, %v833
    %vm835 = vcmask 254976
    %v836 = vsel %vm835, %v772, 0.0
    %v837 = vadd.f32 %v834, %v836
    %v838 = vrot.slane %v837, 4
    %v839 = vadd.f32 %v837, %v838
    %v840 = vrot.slane %v839, 2
    %v841 = vadd.f32 %v839, %v840
    %v842 = vrot.slane %v841, 1
    %v843 = vadd.f32 %v841, %v842
    %v844 = vmul.f32 %v741, %v260
    %v845 = vmul.f32 %v742, %v263
    %v846 = vmul.f32 %v743, %v268
    %v847 = vmul.f32 %v744, %v271
    %v848 = vmul.f32 %v745, %v276
    %v849 = vmul.f32 %v746, %v279
    %v850 = vmul.f32 %v747, %v284
    %v851 = vmul.f32 %v748, %v287
    %v852 = vmul.f32 %v749, %v292
    %v853 = vmul.f32 %v750, %v295
    %v854 = vmul.f32 %v751, %v300
    %v855 = vmul.f32 %v752, %v303
    %v856 = vmul.f32 %v753, %v308
    %v857 = vmul.f32 %v754, %v311
    %v858 = vmul.f32 %v755, %v316
    %v859 = vmul.f32 %v756, %v319
    %v860 = vmul.f32 %v757, %v324
    %v861 = vmul.f32 %v758, %v327
    %v862 = vmul.f32 %v759, %v332
    %v863 = vmul.f32 %v760, %v335
    %v864 = vmul.f32 %v761, %v340
    %v865 = vmul.f32 %v762, %v343
    %v866 = vmul.f32 %v763, %v348
    %v867 = vmul.f32 %v764, %v351
    %v868 = vmul.f32 %v765, %v356
    %v869 = vmul.f32 %v766, %v359
    %v870 = vmul.f32 %v767, %v364
    %v871 = vmul.f32 %v768, %v367
    %v872 = vmul.f32 %v769, %v372
    %v873 = vmul.f32 %v770, %v375
    %v874 = vmul.f32 %v771, %v380
    %v875 = vmul.f32 %v772, %v383
    %v876 = vsel %vm773, %v844, 0.0
    %v877 = vsel %vm773, %v845, 0.0
    %v878 = vadd.f32 %v876, %v877
    %v879 = vsel %vm773, %v846, 0.0
    %v880 = vadd.f32 %v878, %v879
    %v881 = vsel %vm773, %v847, 0.0
    %v882 = vadd.f32 %v880, %v881
    %v883 = vsel %vm773, %v848, 0.0
    %v884 = vadd.f32 %v882, %v883
    %v885 = vsel %vm773, %v849, 0.0
    %v886 = vadd.f32 %v884, %v885
    %v887 = vsel %vm773, %v850, 0.0
    %v888 = vadd.f32 %v886, %v887
    %v889 = vsel %vm773, %v851, 0.0
    %v890 = vadd.f32 %v888, %v889
    %v891 = vsel %vm773, %v852, 0.0
    %v892 = vadd.f32 %v890, %v891
    %v893 = vsel %vm773, %v853, 0.0
    %v894 = vadd.f32 %v892, %v893
    %v895 = vsel %vm773, %v854, 0.0
    %v896 = vadd.f32 %v894, %v895
    %v897 = vsel %vm773, %v855, 0.0
    %v898 = vadd.f32 %v896, %v897
    %v899 = vsel %vm773, %v856, 0.0
    %v900 = vadd.f32 %v898, %v899
    %v901 = vsel %vm773, %v857, 0.0
    %v902 = vadd.f32 %v900, %v901
    %v903 = vsel %vm773, %v858, 0.0
    %v904 = vadd.f32 %v902, %v903
    %v905 = vsel %vm773, %v859, 0.0
    %v906 = vadd.f32 %v904, %v905
    %v907 = vsel %vm773, %v860, 0.0
    %v908 = vadd.f32 %v906, %v907
    %v909 = vsel %vm773, %v861, 0.0
    %v910 = vadd.f32 %v908, %v909
    %v911 = vsel %vm773, %v862, 0.0
    %v912 = vadd.f32 %v910, %v911
    %v913 = vsel %vm773, %v863, 0.0
    %v914 = vadd.f32 %v912, %v913
    %v915 = vsel %vm773, %v864, 0.0
    %v916 = vadd.f32 %v914, %v915
    %v917 = vsel %vm773, %v865, 0.0
    %v918 = vadd.f32 %v916, %v917
    %v919 = vsel %vm773, %v866, 0.0
    %v920 = vadd.f32 %v918, %v919
    %v921 = vsel %vm773, %v867, 0.0
    %v922 = vadd.f32 %v920, %v921
    %v923 = vsel %vm773, %v868, 0.0
    %v924 = vadd.f32 %v922, %v923
    %v925 = vsel %vm773, %v869, 0.0
    %v926 = vadd.f32 %v924, %v925
    %v927 = vsel %vm773, %v870, 0.0
    %v928 = vadd.f32 %v926, %v927
    %v929 = vsel %vm773, %v871, 0.0
    %v930 = vadd.f32 %v928, %v929
    %v931 = vsel %vm773, %v872, 0.0
    %v932 = vadd.f32 %v930, %v931
    %v933 = vsel %vm773, %v873, 0.0
    %v934 = vadd.f32 %v932, %v933
    %v935 = vsel %vm773, %v874, 0.0
    %v936 = vadd.f32 %v934, %v935
    %v937 = vsel %vm835, %v875, 0.0
    %v938 = vadd.f32 %v936, %v937
    %v939 = vrot.slane %v938, 4
    %v940 = vadd.f32 %v938, %v939
    %v941 = vrot.slane %v940, 2
    %v942 = vadd.f32 %v940, %v941
    %v943 = vrot.slane %v942, 1
    %v944 = vadd.f32 %v942, %v943
    %v945 = vld [vmem:[%s3 + $0xa] sm:$0xff]
    %v946 = vld [vmem:[%s3 + $0x12] sm:$0xff]
    %v947 = vld [vmem:[%s3 + $0x1a] sm:$0xff]
    %v948 = vld [vmem:[%s3 + $0x22] sm:$0xff]
    %v950 = vsel %vm773, %v843, 0
    %952 = vmatprep.subr.mxu0 0.0
    %953 = vmatpush1.msra.mxu0 0.0
    %954 = vmatprep.subr.mxu0 0.0
    %955 = vmatpush1.msra.mxu0 0.0
    %956 = vmatprep.subr.mxu0 0.0
    %957 = vmatpush1.msra.mxu0 0.0
    %958 = vmatprep.subr.mxu0 0.0
    %959 = vmatpush1.msra.mxu0 0.0
    %960 = vmatprep.subr.mxu0 0.0
    %961 = vmatpush1.msra.mxu0 0.0
    %962 = vmatprep.subr.mxu0 0.0
    %963 = vmatpush1.msra.mxu0 0.0
    %964 = vmatprep.subr.mxu0 0.0
    %965 = vmatpush1.msra.mxu0 0.0
    %966 = vmatprep.subr.mxu0 0.0
    %967 = vmatpush1.msra.mxu0 0.0
    %968 = vmatprep.subr.mxu0 0.0
    %969 = vmatpush1.msra.mxu0 0.0
    %970 = vmatprep.subr.mxu0 0.0
    %971 = vmatpush1.msra.mxu0 0.0
    %972 = vmatprep.subr.mxu0 0.0
    %973 = vmatpush1.msra.mxu0 0.0
    %974 = vmatprep.subr.mxu0 0.0
    %975 = vmatpush1.msra.mxu0 0.0
    %976 = vmatprep.subr.mxu0 0.0
    %977 = vmatpush1.msra.mxu0 %v948
    %978 = vmatprep.subr.mxu0 0.0
    %979 = vmatpush1.msra.mxu0 %v947
    %980 = vmatprep.subr.mxu0 0.0
    %981 = vmatpush1.msra.mxu0 %v946
    %982 = vmatprep.subr.mxu0 0.0
    %983 = vmatpush1.msra.mxu0 %v945
    %984 = vmatprep.subr.mxu0 0.0
    %985 = vmatpush2.msra.mxu0 0.0
    %986 = vmatprep.subr.mxu0 0.0
    %987 = vmatpush2.msra.mxu0 0.0
    %988 = vmatprep.subr.mxu0 0.0
    %989 = vmatpush2.msra.mxu0 0.0
    %990 = vmatprep.subr.mxu0 0.0
    %991 = vmatpush2.msra.mxu0 0.0
    %992 = vmatprep.subr.mxu0 0.0
    %993 = vmatpush2.msra.mxu0 0.0
    %994 = vmatprep.subr.mxu0 0.0
    %995 = vmatpush2.msra.mxu0 0.0
    %996 = vmatprep.subr.mxu0 0.0
    %997 = vmatpush2.msra.mxu0 0.0
    %998 = vmatprep.subr.mxu0 0.0
    %999 = vmatpush2.msra.mxu0 0.0
    %1000 = vmatprep.subr.mxu0 0.0
    %1001 = vmatpush2.msra.mxu0 0.0
    %1002 = vmatprep.subr.mxu0 0.0
    %1003 = vmatpush2.msra.mxu0 0.0
    %1004 = vmatprep.subr.mxu0 0.0
    %1005 = vmatpush2.msra.mxu0 0.0
    %1006 = vmatprep.subr.mxu0 0.0
    %1007 = vmatpush2.msra.mxu0 0.0
    %1008 = vmatprep.subr.mxu0 0.0
    %1009 = vmatpush2.msra.mxu0 0.0
    %1010 = vmatprep.subr.mxu0 0.0
    %1011 = vmatpush2.msra.mxu0 0.0
    %1012 = vmatprep.subr.mxu0 0.0
    %1013 = vmatpush2.msra.mxu0 0.0
    %1014 = vmatprep.subr.mxu0 0.0
    %1015 = vmatpush2.msra.mxu0 0.0
    %1016 = vmatprep.mubr.f32.mxu0 0.0
    %1017 = vmatmul.mubr.f32.gmra.mxu0 %v950
    %v1018 = vpop.f32.mrf.mxu0
    %v1019 = vadd.f32 0.0, %v1018
    %v1020 = vpop.f32.mrf.mxu0
    %1021 = vdwg.mxu0
    %v1022 = vmul.f32 %v1019, 0.0009765625
    %v1024 = vsel %vm773, %v944, 0
    %1026 = vmatprep.subr.mxu0 0.0
    %1027 = vmatpush1.msra.mxu0 0.0
    %1028 = vmatprep.subr.mxu0 0.0
    %1029 = vmatpush1.msra.mxu0 0.0
    %1030 = vmatprep.subr.mxu0 0.0
    %1031 = vmatpush1.msra.mxu0 0.0
    %1032 = vmatprep.subr.mxu0 0.0
    %1033 = vmatpush1.msra.mxu0 0.0
    %1034 = vmatprep.subr.mxu0 0.0
    %1035 = vmatpush1.msra.mxu0 0.0
    %1036 = vmatprep.subr.mxu0 0.0
    %1037 = vmatpush1.msra.mxu0 0.0
    %1038 = vmatprep.subr.mxu0 0.0
    %1039 = vmatpush1.msra.mxu0 0.0
    %1040 = vmatprep.subr.mxu0 0.0
    %1041 = vmatpush1.msra.mxu0 0.0
    %1042 = vmatprep.subr.mxu0 0.0
    %1043 = vmatpush1.msra.mxu0 0.0
    %1044 = vmatprep.subr.mxu0 0.0
    %1045 = vmatpush1.msra.mxu0 0.0
    %1046 = vmatprep.subr.mxu0 0.0
    %1047 = vmatpush1.msra.mxu0 0.0
    %1048 = vmatprep.subr.mxu0 0.0
    %1049 = vmatpush1.msra.mxu0 0.0
    %1050 = vmatprep.subr.mxu0 0.0
    %1051 = vmatpush1.msra.mxu0 %v948
    %1052 = vmatprep.subr.mxu0 0.0
    %1053 = vmatpush1.msra.mxu0 %v947
    %1054 = vmatprep.subr.mxu0 0.0
    %1055 = vmatpush1.msra.mxu0 %v946
    %1056 = vmatprep.subr.mxu0 0.0
    %1057 = vmatpush1.msra.mxu0 %v945
    %1058 = vmatprep.subr.mxu0 0.0
    %1059 = vmatpush2.msra.mxu0 0.0
    %1060 = vmatprep.subr.mxu0 0.0
    %1061 = vmatpush2.msra.mxu0 0.0
    %1062 = vmatprep.subr.mxu0 0.0
    %1063 = vmatpush2.msra.mxu0 0.0
    %1064 = vmatprep.subr.mxu0 0.0
    %1065 = vmatpush2.msra.mxu0 0.0
    %1066 = vmatprep.subr.mxu0 0.0
    %1067 = vmatpush2.msra.mxu0 0.0
    %1068 = vmatprep.subr.mxu0 0.0
    %1069 = vmatpush2.msra.mxu0 0.0
    %1070 = vmatprep.subr.mxu0 0.0
    %1071 = vmatpush2.msra.mxu0 0.0
    %1072 = vmatprep.subr.mxu0 0.0
    %1073 = vmatpush2.msra.mxu0 0.0
    %1074 = vmatprep.subr.mxu0 0.0
    %1075 = vmatpush2.msra.mxu0 0.0
    %1076 = vmatprep.subr.mxu0 0.0
    %1077 = vmatpush2.msra.mxu0 0.0
    %1078 = vmatprep.subr.mxu0 0.0
    %1079 = vmatpush2.msra.mxu0 0.0
    %1080 = vmatprep.subr.mxu0 0.0
    %1081 = vmatpush2.msra.mxu0 0.0
    %1082 = vmatprep.subr.mxu0 0.0
    %1083 = vmatpush2.msra.mxu0 0.0
    %1084 = vmatprep.subr.mxu0 0.0
    %1085 = vmatpush2.msra.mxu0 0.0
    %1086 = vmatprep.subr.mxu0 0.0
    %1087 = vmatpush2.msra.mxu0 0.0
    %1088 = vmatprep.subr.mxu0 0.0
    %1089 = vmatpush2.msra.mxu0 0.0
    %1090 = vmatprep.mubr.f32.mxu0 0.0
    %1091 = vmatmul.mubr.f32.gmra.mxu0 %v1024
    %v1092 = vpop.f32.mrf.mxu0
    %v1093 = vadd.f32 0.0, %v1092
    %v1094 = vpop.f32.mrf.mxu0
    %1095 = vdwg.mxu0
    %v1096 = vmul.f32 %v1093, 0.0009765625
    %v1097 = vmul.f32 %v1022, %v1022
    %v1098 = vsub.f32 %v1096, %v1097
    %v1099 = vld [vmem:[%s3 + $0x8] sm:$0x1]
    %v1100 = vadd.f32 %v1098, 1e-05
    %v1101 = vrsqrt.pop %v1100
    %v1102 = vmul.f32 %v1099, %v1101
    %v1103 = vld [vmem:[%s3 + $0x9] sm:$0x1]
    %v1104 = vmul.f32 %v1022, %v1102
    %v1105 = vsub.f32 %v1103, %v1104
    %v1106 = vlaneseq
    %v1107 = vshrl.u32 %v1106, 7
    %v1108 = vsub.s32 0, %v1107
    %v1109 = vrot.slane %v1102, %v1108
    %v1110 = vmul.f32 %v260, %v1109
    %v1111 = vmul.f32 %v263, %v1109
    %v1112 = vmul.f32 %v268, %v1109
    %v1113 = vmul.f32 %v271, %v1109
    %v1114 = vmul.f32 %v276, %v1109
    %v1115 = vmul.f32 %v279, %v1109
    %v1116 = vmul.f32 %v284, %v1109
    %v1117 = vmul.f32 %v287, %v1109
    %v1118 = vmul.f32 %v292, %v1109
    %v1119 = vmul.f32 %v295, %v1109
    %v1120 = vmul.f32 %v300, %v1109
    %v1121 = vmul.f32 %v303, %v1109
    %v1122 = vmul.f32 %v308, %v1109
    %v1123 = vmul.f32 %v311, %v1109
    %v1124 = vmul.f32 %v316, %v1109
    %v1125 = vmul.f32 %v319, %v1109
    %v1126 = vmul.f32 %v324, %v1109
    %v1127 = vmul.f32 %v327, %v1109
    %v1128 = vmul.f32 %v332, %v1109
    %v1129 = vmul.f32 %v335, %v1109
    %v1130 = vmul.f32 %v340, %v1109
    %v1131 = vmul.f32 %v343, %v1109
    %v1132 = vmul.f32 %v348, %v1109
    %v1133 = vmul.f32 %v351, %v1109
    %v1134 = vmul.f32 %v356, %v1109
    %v1135 = vmul.f32 %v359, %v1109
    %v1136 = vmul.f32 %v364, %v1109
    %v1137 = vmul.f32 %v367, %v1109
    %v1138 = vmul.f32 %v372, %v1109
    %v1139 = vmul.f32 %v375, %v1109
    %v1140 = vmul.f32 %v380, %v1109
    %v1141 = vmul.f32 %v383, %v1109
    %v1142 = vlaneseq
    %v1143 = vshrl.u32 %v1142, 7
    %v1144 = vsub.s32 0, %v1143
    %v1145 = vrot.slane %v1105, %v1144
    %v1146 = vadd.f32 %v1110, %v1145
    %v1147 = vadd.f32 %v1111, %v1145
    %v1148 = vadd.f32 %v1112, %v1145
    %v1149 = vadd.f32 %v1113, %v1145
    %v1150 = vadd.f32 %v1114, %v1145
    %v1151 = vadd.f32 %v1115, %v1145
    %v1152 = vadd.f32 %v1116, %v1145
    %v1153 = vadd.f32 %v1117, %v1145
    %v1154 = vadd.f32 %v1118, %v1145
    %v1155 = vadd.f32 %v1119, %v1145
    %v1156 = vadd.f32 %v1120, %v1145
    %v1157 = vadd.f32 %v1121, %v1145
    %v1158 = vadd.f32 %v1122, %v1145
    %v1159 = vadd.f32 %v1123, %v1145
    %v1160 = vadd.f32 %v1124, %v1145
    %v1161 = vadd.f32 %v1125, %v1145
    %v1162 = vadd.f32 %v1126, %v1145
    %v1163 = vadd.f32 %v1127, %v1145
    %v1164 = vadd.f32 %v1128, %v1145
    %v1165 = vadd.f32 %v1129, %v1145
    %v1166 = vadd.f32 %v1130, %v1145
    %v1167 = vadd.f32 %v1131, %v1145
    %v1168 = vadd.f32 %v1132, %v1145
    %v1169 = vadd.f32 %v1133, %v1145
    %v1170 = vadd.f32 %v1134, %v1145
    %v1171 = vadd.f32 %v1135, %v1145
    %v1172 = vadd.f32 %v1136, %v1145
    %v1173 = vadd.f32 %v1137, %v1145
    %v1174 = vadd.f32 %v1138, %v1145
    %v1175 = vadd.f32 %v1139, %v1145
    %v1176 = vadd.f32 %v1140, %v1145
    %v1177 = vadd.f32 %v1141, %v1145
    %v1178 = vmax.f32 %v1146, 0.0
    %v1179 = vmax.f32 %v1147, 0.0
    %v1180 = vmax.f32 %v1148, 0.0
    %v1181 = vmax.f32 %v1149, 0.0
    %v1182 = vmax.f32 %v1150, 0.0
    %v1183 = vmax.f32 %v1151, 0.0
    %v1184 = vmax.f32 %v1152, 0.0
    %v1185 = vmax.f32 %v1153, 0.0
    %v1186 = vmax.f32 %v1154, 0.0
    %v1187 = vmax.f32 %v1155, 0.0
    %v1188 = vmax.f32 %v1156, 0.0
    %v1189 = vmax.f32 %v1157, 0.0
    %v1190 = vmax.f32 %v1158, 0.0
    %v1191 = vmax.f32 %v1159, 0.0
    %v1192 = vmax.f32 %v1160, 0.0
    %v1193 = vmax.f32 %v1161, 0.0
    %v1194 = vmax.f32 %v1162, 0.0
    %v1195 = vmax.f32 %v1163, 0.0
    %v1196 = vmax.f32 %v1164, 0.0
    %v1197 = vmax.f32 %v1165, 0.0
    %v1198 = vmax.f32 %v1166, 0.0
    %v1199 = vmax.f32 %v1167, 0.0
    %v1200 = vmax.f32 %v1168, 0.0
    %v1201 = vmax.f32 %v1169, 0.0
    %v1202 = vmax.f32 %v1170, 0.0
    %v1203 = vmax.f32 %v1171, 0.0
    %v1204 = vmax.f32 %v1172, 0.0
    %v1205 = vmax.f32 %v1173, 0.0
    %v1206 = vmax.f32 %v1174, 0.0
    %v1207 = vmax.f32 %v1175, 0.0
    %v1208 = vmax.f32 %v1176, 0.0
    %v1209 = vmax.f32 %v1177, 0.0
    %v1210 = vpack.c.bf16 %v1179, %v1178
    %v1211 = vpack.c.bf16 %v1181, %v1180
    %v1212 = vpack.c.bf16 %v1183, %v1182
    %v1213 = vpack.c.bf16 %v1185, %v1184
    %v1214 = vpack.c.bf16 %v1187, %v1186
    %v1215 = vpack.c.bf16 %v1189, %v1188
    %v1216 = vpack.c.bf16 %v1191, %v1190
    %v1217 = vpack.c.bf16 %v1193, %v1192
    %v1218 = vpack.c.bf16 %v1195, %v1194
    %v1219 = vpack.c.bf16 %v1197, %v1196
    %v1220 = vpack.c.bf16 %v1199, %v1198
    %v1221 = vpack.c.bf16 %v1201, %v1200
    %v1222 = vpack.c.bf16 %v1203, %v1202
    %v1223 = vpack.c.bf16 %v1205, %v1204
    %v1224 = vpack.c.bf16 %v1207, %v1206
    %v1225 = vpack.c.bf16 %v1209, %v1208
    %v1242 = vunpack.c.l.b16 %v1210
    %v1243 = vunpack.c.h.b16 %v1210
    %v1244 = vunpack.c.l.b16 %v1211
    %v1245 = vunpack.c.h.b16 %v1211
    %v1246 = vunpack.c.l.b16 %v1212
    %v1247 = vunpack.c.h.b16 %v1212
    %v1248 = vunpack.c.l.b16 %v1213
    %v1249 = vunpack.c.h.b16 %v1213
    %v1250 = vunpack.c.l.b16 %v1214
    %v1251 = vunpack.c.h.b16 %v1214
    %v1252 = vunpack.c.l.b16 %v1215
    %v1253 = vunpack.c.h.b16 %v1215
    %v1254 = vunpack.c.l.b16 %v1216
    %v1255 = vunpack.c.h.b16 %v1216
    %v1256 = vunpack.c.l.b16 %v1217
    %v1257 = vunpack.c.h.b16 %v1217
    %v1258 = vunpack.c.l.b16 %v1218
    %v1259 = vunpack.c.h.b16 %v1218
    %v1260 = vunpack.c.l.b16 %v1219
    %v1261 = vunpack.c.h.b16 %v1219
    %v1262 = vunpack.c.l.b16 %v1220
    %v1263 = vunpack.c.h.b16 %v1220
    %v1264 = vunpack.c.l.b16 %v1221
    %v1265 = vunpack.c.h.b16 %v1221
    %v1266 = vunpack.c.l.b16 %v1222
    %v1267 = vunpack.c.h.b16 %v1222
    %v1268 = vunpack.c.l.b16 %v1223
    %v1269 = vunpack.c.h.b16 %v1223
    %v1270 = vunpack.c.l.b16 %v1224
    %v1271 = vunpack.c.h.b16 %v1224
    %v1272 = vunpack.c.l.b16 %v1225
    %v1273 = vunpack.c.h.b16 %v1225
    %v1274 = vpack.c.b16 %v1242, %v1242
    %v1275 = vpack.c.b16 %v1243, %v1243
    %v1276 = vpack.c.b16 %v1244, %v1244
    %v1277 = vpack.c.b16 %v1245, %v1245
    %v1278 = vpack.c.b16 %v1246, %v1246
    %v1279 = vpack.c.b16 %v1247, %v1247
    %v1280 = vpack.c.b16 %v1248, %v1248
    %v1281 = vpack.c.b16 %v1249, %v1249
    %v1282 = vpack.c.b16 %v1250, %v1250
    %v1283 = vpack.c.b16 %v1251, %v1251
    %v1284 = vpack.c.b16 %v1252, %v1252
    %v1285 = vpack.c.b16 %v1253, %v1253
    %v1286 = vpack.c.b16 %v1254, %v1254
    %v1287 = vpack.c.b16 %v1255, %v1255
    %v1288 = vpack.c.b16 %v1256, %v1256
    %v1289 = vpack.c.b16 %v1257, %v1257
    %v1290 = vpack.c.b16 %v1258, %v1258
    %v1291 = vpack.c.b16 %v1259, %v1259
    %v1292 = vpack.c.b16 %v1260, %v1260
    %v1293 = vpack.c.b16 %v1261, %v1261
    %v1294 = vpack.c.b16 %v1262, %v1262
    %v1295 = vpack.c.b16 %v1263, %v1263
    %v1296 = vpack.c.b16 %v1264, %v1264
    %v1297 = vpack.c.b16 %v1265, %v1265
    %v1298 = vpack.c.b16 %v1266, %v1266
    %v1299 = vpack.c.b16 %v1267, %v1267
    %v1300 = vpack.c.b16 %v1268, %v1268
    %v1301 = vpack.c.b16 %v1269, %v1269
    %v1302 = vpack.c.b16 %v1270, %v1270
    %v1303 = vpack.c.b16 %v1271, %v1271
    %v1304 = vpack.c.b16 %v1272, %v1272
    %v1305 = vpack.c.b16 %v1273, %v1273
    %vm1338 = vcmask 257024
    %1339 = vst.msk [vmem:[%s4] sm:$0xf] %vm1338, %v1274
    %1340 = vst.msk [vmem:[%s4 + $0x4] sm:$0xf] %vm1338, %v1275
    %1341 = vst.msk [vmem:[%s4 + $0x8] sm:$0xf] %vm1338, %v1276
    %1342 = vst.msk [vmem:[%s4 + $0xc] sm:$0xf] %vm1338, %v1277
    %1343 = vst.msk [vmem:[%s4 + $0x10] sm:$0xf] %vm1338, %v1278
    %1344 = vst.msk [vmem:[%s4 + $0x14] sm:$0xf] %vm1338, %v1279
    %1345 = vst.msk [vmem:[%s4 + $0x18] sm:$0xf] %vm1338, %v1280
    %1346 = vst.msk [vmem:[%s4 + $0x1c] sm:$0xf] %vm1338, %v1281
    %1347 = vst.msk [vmem:[%s4 + $0x20] sm:$0xf] %vm1338, %v1282
    %1348 = vst.msk [vmem:[%s4 + $0x24] sm:$0xf] %vm1338, %v1283
    %1349 = vst.msk [vmem:[%s4 + $0x28] sm:$0xf] %vm1338, %v1284
    %1350 = vst.msk [vmem:[%s4 + $0x2c] sm:$0xf] %vm1338, %v1285
    %1351 = vst.msk [vmem:[%s4 + $0x30] sm:$0xf] %vm1338, %v1286
    %1352 = vst.msk [vmem:[%s4 + $0x34] sm:$0xf] %vm1338, %v1287
    %1353 = vst.msk [vmem:[%s4 + $0x38] sm:$0xf] %vm1338, %v1288
    %1354 = vst.msk [vmem:[%s4 + $0x3c] sm:$0xf] %vm1338, %v1289
    %1355 = vst.msk [vmem:[%s4 + $0x40] sm:$0xf] %vm1338, %v1290
    %1356 = vst.msk [vmem:[%s4 + $0x44] sm:$0xf] %vm1338, %v1291
    %1357 = vst.msk [vmem:[%s4 + $0x48] sm:$0xf] %vm1338, %v1292
    %1358 = vst.msk [vmem:[%s4 + $0x4c] sm:$0xf] %vm1338, %v1293
    %1359 = vst.msk [vmem:[%s4 + $0x50] sm:$0xf] %vm1338, %v1294
    %1360 = vst.msk [vmem:[%s4 + $0x54] sm:$0xf] %vm1338, %v1295
    %1361 = vst.msk [vmem:[%s4 + $0x58] sm:$0xf] %vm1338, %v1296
    %1362 = vst.msk [vmem:[%s4 + $0x5c] sm:$0xf] %vm1338, %v1297
    %1363 = vst.msk [vmem:[%s4 + $0x60] sm:$0xf] %vm1338, %v1298
    %1364 = vst.msk [vmem:[%s4 + $0x64] sm:$0xf] %vm1338, %v1299
    %1365 = vst.msk [vmem:[%s4 + $0x68] sm:$0xf] %vm1338, %v1300
    %1366 = vst.msk [vmem:[%s4 + $0x6c] sm:$0xf] %vm1338, %v1301
    %1367 = vst.msk [vmem:[%s4 + $0x70] sm:$0xf] %vm1338, %v1302
    %1368 = vst.msk [vmem:[%s4 + $0x74] sm:$0xf] %vm1338, %v1303
    %1369 = vst.msk [vmem:[%s4 + $0x78] sm:$0xf] %vm1338, %v1304
    %vm1370 = vcmask 253952
    %1371 = vst.msk [vmem:[%s4 + $0x7c] sm:$0x1] %vm1370, %v1305
    // Predicated region
    $region22: #{conv_generator_forward.6} parent=1 // pred_check
      _
    $region23: #{conv_generator_forward.6} parent=1 // pred_check_branch
      %1373 = sbr.rel (0) target = $region25
    $region24: #{conv_generator_forward.6} parent=1 // pred_region
      _
    $region25: #{conv_generator_forward.6} parent=1 // pred_fallthru
      _
    // Predicated region
    $region26: #{conv_generator_forward.6} parent=1 // pred_check
      _
    $region27: #{conv_generator_forward.6} parent=1 // pred_check_branch
      %1375 = sbr.rel (0) target = $region29
    $region28: #{conv_generator_forward.6} parent=1 // pred_region
      _
    $region29: #{conv_generator_forward.6} parent=1 // pred_fallthru
      _
    %1376 = vsyncpa [#allocation3], 1

// kernel: conv_generator_forward.7
$region0: #{conv_generator_forward.7}
  #allocation0 [shape = 'u32[]', space=smem, size = 0x4, offset = 0x4, fixed_abs, tag = 'smem constant byte address 0x4 - core index']
  #allocation1 [shape = 'u32[144,128]{1,0:T(1,128)}', space=vmem, size = 0x12000, scoped, tag = 'internal scratch']
  %s0 = inlined_call_operand.vmem [shape: bf16[8,32], index: 0, kind: input, shape index: {}]
  %s1 = inlined_call_operand.vmem [shape: bf16[32,1536], index: 1, kind: input, shape index: {}]
  %s2 = inlined_call_operand.vmem [shape: f32[8,1536], index: 2, kind: output, shape index: {}]
  %s3 = sld [smem:[#allocation0]]
  $region18: #{conv_generator_forward.7} parent=0
    _
  %s5 = ssub.s32 1, %s3
  %s6 = scalar_select 0, %s5, %s3
  // Predicated region
  $region2: #{conv_generator_forward.7} parent=0 // pred_check
    _
  $region3: #{conv_generator_forward.7} parent=0 // pred_check_branch
    %8 = sbr.rel (0) target = $region5
  $region4: #{conv_generator_forward.7} parent=0 // pred_region
    _
  $region5: #{conv_generator_forward.7} parent=0 // pred_fallthru
    _
  // Predicated region
  $region6: #{conv_generator_forward.7} parent=0 // pred_check
    _
  $region7: #{conv_generator_forward.7} parent=0 // pred_check_branch
    %10 = sbr.rel (0) target = $region9
  $region8: #{conv_generator_forward.7} parent=0 // pred_region
    _
  $region9: #{conv_generator_forward.7} parent=0 // pred_fallthru
    _
  %v12 = vld [vmem:[%s0] sm:$0xf]
  %v13 = vld [vmem:[%s1] sm:$0xff]
  %v14 = vld [vmem:[%s1 + $0x8] sm:$0xff]
  %v15 = vld [vmem:[%s1 + $0x10] sm:$0xff]
  %v16 = vld [vmem:[%s1 + $0x18] sm:$0xff]
  %v17 = vld [vmem:[%s1 + $0x20] sm:$0xff]
  %v18 = vld [vmem:[%s1 + $0x28] sm:$0xff]
  %v19 = vld [vmem:[%s1 + $0x30] sm:$0xff]
  %v20 = vld [vmem:[%s1 + $0x38] sm:$0xff]
  %v21 = vld [vmem:[%s1 + $0x40] sm:$0xff]
  %v22 = vld [vmem:[%s1 + $0x48] sm:$0xff]
  %v23 = vld [vmem:[%s1 + $0x50] sm:$0xff]
  %v24 = vld [vmem:[%s1 + $0x58] sm:$0xff]
  %v25 = vld [vmem:[%s1 + $0x60] sm:$0xff]
  %v26 = vld [vmem:[%s1 + $0x68] sm:$0xff]
  %v27 = vld [vmem:[%s1 + $0x70] sm:$0xff]
  %v28 = vld [vmem:[%s1 + $0x78] sm:$0xff]
  %v29 = vld [vmem:[%s1 + $0x80] sm:$0xff]
  %v30 = vld [vmem:[%s1 + $0x88] sm:$0xff]
  %v31 = vld [vmem:[%s1 + $0x90] sm:$0xff]
  %v32 = vld [vmem:[%s1 + $0x98] sm:$0xff]
  %v33 = vld [vmem:[%s1 + $0xa0] sm:$0xff]
  %v34 = vld [vmem:[%s1 + $0xa8] sm:$0xff]
  %v35 = vld [vmem:[%s1 + $0xb0] sm:$0xff]
  %v36 = vld [vmem:[%s1 + $0xb8] sm:$0xff]
  %v61 = vunpack.c.l.b16 %v13
  %v62 = vunpack.c.h.b16 %v13
  %v63 = vunpack.c.l.b16 %v14
  %v64 = vunpack.c.h.b16 %v14
  %v65 = vunpack.c.l.b16 %v15
  %v66 = vunpack.c.h.b16 %v15
  %v67 = vunpack.c.l.b16 %v16
  %v68 = vunpack.c.h.b16 %v16
  %v69 = vunpack.c.l.b16 %v17
  %v70 = vunpack.c.h.b16 %v17
  %v71 = vunpack.c.l.b16 %v18
  %v72 = vunpack.c.h.b16 %v18
  %v73 = vunpack.c.l.b16 %v19
  %v74 = vunpack.c.h.b16 %v19
  %v75 = vunpack.c.l.b16 %v20
  %v76 = vunpack.c.h.b16 %v20
  %v77 = vunpack.c.l.b16 %v21
  %v78 = vunpack.c.h.b16 %v21
  %v79 = vunpack.c.l.b16 %v22
  %v80 = vunpack.c.h.b16 %v22
  %v81 = vunpack.c.l.b16 %v23
  %v82 = vunpack.c.h.b16 %v23
  %v83 = vunpack.c.l.b16 %v24
  %v84 = vunpack.c.h.b16 %v24
  %v85 = vunpack.c.l.b16 %v25
  %v86 = vunpack.c.h.b16 %v25
  %v87 = vunpack.c.l.b16 %v26
  %v88 = vunpack.c.h.b16 %v26
  %v89 = vunpack.c.l.b16 %v27
  %v90 = vunpack.c.h.b16 %v27
  %v91 = vunpack.c.l.b16 %v28
  %v92 = vunpack.c.h.b16 %v28
  %v93 = vunpack.c.l.b16 %v29
  %v94 = vunpack.c.h.b16 %v29
  %v95 = vunpack.c.l.b16 %v30
  %v96 = vunpack.c.h.b16 %v30
  %v97 = vunpack.c.l.b16 %v31
  %v98 = vunpack.c.h.b16 %v31
  %v99 = vunpack.c.l.b16 %v32
  %v100 = vunpack.c.h.b16 %v32
  %v101 = vunpack.c.l.b16 %v33
  %v102 = vunpack.c.h.b16 %v33
  %v103 = vunpack.c.l.b16 %v34
  %v104 = vunpack.c.h.b16 %v34
  %v105 = vunpack.c.l.b16 %v35
  %v106 = vunpack.c.h.b16 %v35
  %v107 = vunpack.c.l.b16 %v36
  %v108 = vunpack.c.h.b16 %v36
  %v109 = vpack.c.b16 %v73, %v61
  %v110 = vpack.c.b16 %v74, %v62
  %v111 = vpack.c.b16 %v75, %v63
  %v112 = vpack.c.b16 %v76, %v64
  %v113 = vpack.c.b16 %v77, %v65
  %v114 = vpack.c.b16 %v78, %v66
  %v115 = vpack.c.b16 %v79, %v67
  %v116 = vpack.c.b16 %v80, %v68
  %v117 = vpack.c.b16 %v81, %v69
  %v118 = vpack.c.b16 %v82, %v70
  %v119 = vpack.c.b16 %v83, %v71
  %v120 = vpack.c.b16 %v84, %v72
  %v121 = vpack.c.b16 %v97, %v85
  %v122 = vpack.c.b16 %v98, %v86
  %v123 = vpack.c.b16 %v99, %v87
  %v124 = vpack.c.b16 %v100, %v88
  %v125 = vpack.c.b16 %v101, %v89
  %v126 = vpack.c.b16 %v102, %v90
  %v127 = vpack.c.b16 %v103, %v91
  %v128 = vpack.c.b16 %v104, %v92
  %v129 = vpack.c.b16 %v105, %v93
  %v130 = vpack.c.b16 %v106, %v94
  %v131 = vpack.c.b16 %v107, %v95
  %v132 = vpack.c.b16 %v108, %v96
  %vm157 = vcmask 261120
  %v159 = vsel %vm157, %v12, 0
  %161 = vmatprep.subr.bf16.mxu0 0
  %162 = vmatpush1.bf16.msra.mxu0 0
  %163 = vmatprep.subr.bf16.mxu0 0
  %164 = vmatpush1.bf16.msra.mxu0 0
  %165 = vmatprep.subr.bf16.mxu0 0
  %166 = vmatpush1.bf16.msra.mxu0 0
  %167 = vmatprep.subr.bf16.mxu0 0
  %168 = vmatpush1.bf16.msra.mxu0 0
  %169 = vmatprep.subr.bf16.mxu0 0
  %170 = vmatpush1.bf16.msra.mxu0 0
  %171 = vmatprep.subr.bf16.mxu0 0
  %172 = vmatpush1.bf16.msra.mxu0 0
  %173 = vmatprep.subr.bf16.mxu0 %v122
  %174 = vmatpush1.bf16.msra.mxu0 %v121
  %175 = vmatprep.subr.bf16.mxu0 %v110
  %176 = vmatpush1.bf16.msra.mxu0 %v109
  %177 = vmatprep.subr.bf16.mxu0 0
  %178 = vmatpush2.bf16.msra.mxu0 0
  %179 = vmatprep.subr.bf16.mxu0 0
  %180 = vmatpush2.bf16.msra.mxu0 0
  %181 = vmatprep.subr.bf16.mxu0 0
  %182 = vmatpush2.bf16.msra.mxu0 0
  %183 = vmatprep.subr.bf16.mxu0 0
  %184 = vmatpush2.bf16.msra.mxu0 0
  %185 = vmatprep.subr.bf16.mxu0 0
  %186 = vmatpush2.bf16.msra.mxu0 0
  %187 = vmatprep.subr.bf16.mxu0 0
  %188 = vmatpush2.bf16.msra.mxu0 0
  %189 = vmatprep.subr.bf16.mxu0 0
  %190 = vmatpush2.bf16.msra.mxu0 0
  %191 = vmatprep.subr.bf16.mxu0 0
  %192 = vmatpush2.bf16.msra.mxu0 0
  %193 = vmatprep.mubr.bf16.mxu0 0
  %194 = vmatmul.mubr.bf16.gmra.mxu0 %v159
  %v195 = vpop.f32.mrf.mxu0
  %v196 = vadd.f32 0.0, %v195
  %v197 = vpop.f32.mrf.mxu0
  %v198 = vadd.f32 0.0, %v197
  %v199 = vpop.f32.mrf.mxu0
  %v200 = vpop.f32.mrf.mxu0
  %201 = vdwg.mxu0
  %202 = vmatprep.subr.bf16.mxu0 0
  %203 = vmatpush1.bf16.msra.mxu0 0
  %204 = vmatprep.subr.bf16.mxu0 0
  %205 = vmatpush1.bf16.msra.mxu0 0
  %206 = vmatprep.subr.bf16.mxu0 0
  %207 = vmatpush1.bf16.msra.mxu0 0
  %208 = vmatprep.subr.bf16.mxu0 0
  %209 = vmatpush1.bf16.msra.mxu0 0
  %210 = vmatprep.subr.bf16.mxu0 0
  %211 = vmatpush1.bf16.msra.mxu0 0
  %212 = vmatprep.subr.bf16.mxu0 0
  %213 = vmatpush1.bf16.msra.mxu0 0
  %214 = vmatprep.subr.bf16.mxu0 %v124
  %215 = vmatpush1.bf16.msra.mxu0 %v123
  %216 = vmatprep.subr.bf16.mxu0 %v112
  %217 = vmatpush1.bf16.msra.mxu0 %v111
  %218 = vmatprep.subr.bf16.mxu0 0
  %219 = vmatpush2.bf16.msra.mxu0 0
  %220 = vmatprep.subr.bf16.mxu0 0
  %221 = vmatpush2.bf16.msra.mxu0 0
  %222 = vmatprep.subr.bf16.mxu0 0
  %223 = vmatpush2.bf16.msra.mxu0 0
  %224 = vmatprep.subr.bf16.mxu0 0
  %225 = vmatpush2.bf16.msra.mxu0 0
  %226 = vmatprep.subr.bf16.mxu0 0
  %227 = vmatpush2.bf16.msra.mxu0 0
  %228 = vmatprep.subr.bf16.mxu0 0
  %229 = vmatpush2.bf16.msra.mxu0 0
  %230 = vmatprep.subr.bf16.mxu0 0
  %231 = vmatpush2.bf16.msra.mxu0 0
  %232 = vmatprep.subr.bf16.mxu0 0
  %233 = vmatpush2.bf16.msra.mxu0 0
  %234 = vmatprep.mubr.bf16.mxu0 0
  %235 = vmatmul.mubr.bf16.gmra.mxu0 %v159
  %v236 = vpop.f32.mrf.mxu0
  %v237 = vadd.f32 0.0, %v236
  %v238 = vpop.f32.mrf.mxu0
  %v239 = vadd.f32 0.0, %v238
  %v240 = vpop.f32.mrf.mxu0
  %v241 = vpop.f32.mrf.mxu0
  %242 = vdwg.mxu0
  %243 = vmatprep.subr.bf16.mxu0 0
  %244 = vmatpush1.bf16.msra.mxu0 0
  %245 = vmatprep.subr.bf16.mxu0 0
  %246 = vmatpush1.bf16.msra.mxu0 0
  %247 = vmatprep.subr.bf16.mxu0 0
  %248 = vmatpush1.bf16.msra.mxu0 0
  %249 = vmatprep.subr.bf16.mxu0 0
  %250 = vmatpush1.bf16.msra.mxu0 0
  %251 = vmatprep.subr.bf16.mxu0 0
  %252 = vmatpush1.bf16.msra.mxu0 0
  %253 = vmatprep.subr.bf16.mxu0 0
  %254 = vmatpush1.bf16.msra.mxu0 0
  %255 = vmatprep.subr.bf16.mxu0 %v126
  %256 = vmatpush1.bf16.msra.mxu0 %v125
  %257 = vmatprep.subr.bf16.mxu0 %v114
  %258 = vmatpush1.bf16.msra.mxu0 %v113
  %259 = vmatprep.subr.bf16.mxu0 0
  %260 = vmatpush2.bf16.msra.mxu0 0
  %261 = vmatprep.subr.bf16.mxu0 0
  %262 = vmatpush2.bf16.msra.mxu0 0
  %263 = vmatprep.subr.bf16.mxu0 0
  %264 = vmatpush2.bf16.msra.mxu0 0
  %265 = vmatprep.subr.bf16.mxu0 0
  %266 = vmatpush2.bf16.msra.mxu0 0
  %267 = vmatprep.subr.bf16.mxu0 0
  %268 = vmatpush2.bf16.msra.mxu0 0
  %269 = vmatprep.subr.bf16.mxu0 0
  %270 = vmatpush2.bf16.msra.mxu0 0
  %271 = vmatprep.subr.bf16.mxu0 0
  %272 = vmatpush2.bf16.msra.mxu0 0
  %273 = vmatprep.subr.bf16.mxu0 0
  %274 = vmatpush2.bf16.msra.mxu0 0
  %275 = vmatprep.mubr.bf16.mxu0 0
  %276 = vmatmul.mubr.bf16.gmra.mxu0 %v159
  %v277 = vpop.f32.mrf.mxu0
  %v278 = vadd.f32 0.0, %v277
  %v279 = vpop.f32.mrf.mxu0
  %v280 = vadd.f32 0.0, %v279
  %v281 = vpop.f32.mrf.mxu0
  %v282 = vpop.f32.mrf.mxu0
  %283 = vdwg.mxu0
  %284 = vmatprep.subr.bf16.mxu0 0
  %285 = vmatpush1.bf16.msra.mxu0 0
  %286 = vmatprep.subr.bf16.mxu0 0
  %287 = vmatpush1.bf16.msra.mxu0 0
  %288 = vmatprep.subr.bf16.mxu0 0
  %289 = vmatpush1.bf16.msra.mxu0 0
  %290 = vmatprep.subr.bf16.mxu0 0
  %291 = vmatpush1.bf16.msra.mxu0 0
  %292 = vmatprep.subr.bf16.mxu0 0
  %293 = vmatpush1.bf16.msra.mxu0 0
  %294 = vmatprep.subr.bf16.mxu0 0
  %295 = vmatpush1.bf16.msra.mxu0 0
  %296 = vmatprep.subr.bf16.mxu0 %v128
  %297 = vmatpush1.bf16.msra.mxu0 %v127
  %298 = vmatprep.subr.bf16.mxu0 %v116
  %299 = vmatpush1.bf16.msra.mxu0 %v115
  %300 = vmatprep.subr.bf16.mxu0 0
  %301 = vmatpush2.bf16.msra.mxu0 0
  %302 = vmatprep.subr.bf16.mxu0 0
  %303 = vmatpush2.bf16.msra.mxu0 0
  %304 = vmatprep.subr.bf16.mxu0 0
  %305 = vmatpush2.bf16.msra.mxu0 0
  %306 = vmatprep.subr.bf16.mxu0 0
  %307 = vmatpush2.bf16.msra.mxu0 0
  %308 = vmatprep.subr.bf16.mxu0 0
  %309 = vmatpush2.bf16.msra.mxu0 0
  %310 = vmatprep.subr.bf16.mxu0 0
  %311 = vmatpush2.bf16.msra.mxu0 0
  %312 = vmatprep.subr.bf16.mxu0 0
  %313 = vmatpush2.bf16.msra.mxu0 0
  %314 = vmatprep.subr.bf16.mxu0 0
  %315 = vmatpush2.bf16.msra.mxu0 0
  %316 = vmatprep.mubr.bf16.mxu0 0
  %317 = vmatmul.mubr.bf16.gmra.mxu0 %v159
  %v318 = vpop.f32.mrf.mxu0
  %v319 = vadd.f32 0.0, %v318
  %v320 = vpop.f32.mrf.mxu0
  %v321 = vadd.f32 0.0, %v320
  %v322 = vpop.f32.mrf.mxu0
  %v323 = vpop.f32.mrf.mxu0
  %324 = vdwg.mxu0
  %325 = vmatprep.subr.bf16.mxu0 0
  %326 = vmatpush1.bf16.msra.mxu0 0
  %327 = vmatprep.subr.bf16.mxu0 0
  %328 = vmatpush1.bf16.msra.mxu0 0
  %329 = vmatprep.subr.bf16.mxu0 0
  %330 = vmatpush1.bf16.msra.mxu0 0
  %331 = vmatprep.subr.bf16.mxu0 0
  %332 = vmatpush1.bf16.msra.mxu0 0
  %333 = vmatprep.subr.bf16.mxu0 0
  %334 = vmatpush1.bf16.msra.mxu0 0
  %335 = vmatprep.subr.bf16.mxu0 0
  %336 = vmatpush1.bf16.msra.mxu0 0
  %337 = vmatprep.subr.bf16.mxu0 %v130
  %338 = vmatpush1.bf16.msra.mxu0 %v129
  %339 = vmatprep.subr.bf16.mxu0 %v118
  %340 = vmatpush1.bf16.msra.mxu0 %v117
  %341 = vmatprep.subr.bf16.mxu0 0
  %342 = vmatpush2.bf16.msra.mxu0 0
  %343 = vmatprep.subr.bf16.mxu0 0
  %344 = vmatpush2.bf16.msra.mxu0 0
  %345 = vmatprep.subr.bf16.mxu0 0
  %346 = vmatpush2.bf16.msra.mxu0 0
  %347 = vmatprep.subr.bf16.mxu0 0
  %348 = vmatpush2.bf16.msra.mxu0 0
  %349 = vmatprep.subr.bf16.mxu0 0
  %350 = vmatpush2.bf16.msra.mxu0 0
  %351 = vmatprep.subr.bf16.mxu0 0
  %352 = vmatpush2.bf16.msra.mxu0 0
  %353 = vmatprep.subr.bf16.mxu0 0
  %354 = vmatpush2.bf16.msra.mxu0 0
  %355 = vmatprep.subr.bf16.mxu0 0
  %356 = vmatpush2.bf16.msra.mxu0 0
  %357 = vmatprep.mubr.bf16.mxu0 0
  %358 = vmatmul.mubr.bf16.gmra.mxu0 %v159
  %v359 = vpop.f32.mrf.mxu0
  %v360 = vadd.f32 0.0, %v359
  %v361 = vpop.f32.mrf.mxu0
  %v362 = vadd.f32 0.0, %v361
  %v363 = vpop.f32.mrf.mxu0
  %v364 = vpop.f32.mrf.mxu0
  %365 = vdwg.mxu0
  %366 = vmatprep.subr.bf16.mxu0 0
  %367 = vmatpush1.bf16.msra.mxu0 0
  %368 = vmatprep.subr.bf16.mxu0 0
  %369 = vmatpush1.bf16.msra.mxu0 0
  %370 = vmatprep.subr.bf16.mxu0 0
  %371 = vmatpush1.bf16.msra.mxu0 0
  %372 = vmatprep.subr.bf16.mxu0 0
  %373 = vmatpush1.bf16.msra.mxu0 0
  %374 = vmatprep.subr.bf16.mxu0 0
  %375 = vmatpush1.bf16.msra.mxu0 0
  %376 = vmatprep.subr.bf16.mxu0 0
  %377 = vmatpush1.bf16.msra.mxu0 0
  %378 = vmatprep.subr.bf16.mxu0 %v132
  %379 = vmatpush1.bf16.msra.mxu0 %v131
  %380 = vmatprep.subr.bf16.mxu0 %v120
  %381 = vmatpush1.bf16.msra.mxu0 %v119
  %382 = vmatprep.subr.bf16.mxu0 0
  %383 = vmatpush2.bf16.msra.mxu0 0
  %384 = vmatprep.subr.bf16.mxu0 0
  %385 = vmatpush2.bf16.msra.mxu0 0
  %386 = vmatprep.subr.bf16.mxu0 0
  %387 = vmatpush2.bf16.msra.mxu0 0
  %388 = vmatprep.subr.bf16.mxu0 0
  %389 = vmatpush2.bf16.msra.mxu0 0
  %390 = vmatprep.subr.bf16.mxu0 0
  %391 = vmatpush2.bf16.msra.mxu0 0
  %392 = vmatprep.subr.bf16.mxu0 0
  %393 = vmatpush2.bf16.msra.mxu0 0
  %394 = vmatprep.subr.bf16.mxu0 0
  %395 = vmatpush2.bf16.msra.mxu0 0
  %396 = vmatprep.subr.bf16.mxu0 0
  %397 = vmatpush2.bf16.msra.mxu0 0
  %398 = vmatprep.mubr.bf16.mxu0 0
  %399 = vmatmul.mubr.bf16.gmra.mxu0 %v159
  %v400 = vpop.f32.mrf.mxu0
  %v401 = vadd.f32 0.0, %v400
  %v402 = vpop.f32.mrf.mxu0
  %v403 = vadd.f32 0.0, %v402
  %v404 = vpop.f32.mrf.mxu0
  %v405 = vpop.f32.mrf.mxu0
  %406 = vdwg.mxu0
  %v407 = vsub.f32 0.0, %v196
  %v408 = vsub.f32 0.0, %v198
  %v409 = vsub.f32 0.0, %v237
  %v410 = vsub.f32 0.0, %v239
  %v411 = vsub.f32 0.0, %v278
  %v412 = vsub.f32 0.0, %v280
  %v413 = vsub.f32 0.0, %v319
  %v414 = vsub.f32 0.0, %v321
  %v415 = vsub.f32 0.0, %v360
  %v416 = vsub.f32 0.0, %v362
  %v417 = vsub.f32 0.0, %v401
  %v418 = vsub.f32 0.0, %v403
  %v419 = vmul.f32 %v407, 1.442695
  %v420 = vpow.pop %v419
  %v421 = vmul.f32 %v408, 1.442695
  %v422 = vpow.pop %v421
  %v423 = vmul.f32 %v409, 1.442695
  %v424 = vpow.pop %v423
  %v425 = vmul.f32 %v410, 1.442695
  %v426 = vpow.pop %v425
  %v427 = vmul.f32 %v411, 1.442695
  %v428 = vpow.pop %v427
  %v429 = vmul.f32 %v412, 1.442695
  %v430 = vpow.pop %v429
  %v431 = vmul.f32 %v413, 1.442695
  %v432 = vpow.pop %v431
  %v433 = vmul.f32 %v414, 1.442695
  %v434 = vpow.pop %v433
  %v435 = vmul.f32 %v415, 1.442695
  %v436 = vpow.pop %v435
  %v437 = vmul.f32 %v416, 1.442695
  %v438 = vpow.pop %v437
  %v439 = vmul.f32 %v417, 1.442695
  %v440 = vpow.pop %v439
  %v441 = vmul.f32 %v418, 1.442695
  %v442 = vpow.pop %v441
  %v443 = vadd.f32 %v420, 1.0
  %v444 = vadd.f32 %v422, 1.0
  %v445 = vadd.f32 %v424, 1.0
  %v446 = vadd.f32 %v426, 1.0
  %v447 = vadd.f32 %v428, 1.0
  %v448 = vadd.f32 %v430, 1.0
  %v449 = vadd.f32 %v432, 1.0
  %v450 = vadd.f32 %v434, 1.0
  %v451 = vadd.f32 %v436, 1.0
  %v452 = vadd.f32 %v438, 1.0
  %v453 = vadd.f32 %v440, 1.0
  %v454 = vadd.f32 %v442, 1.0
  %v455 = vrcp.pop %v443
  %v456 = vrcp.pop %v444
  %v457 = vrcp.pop %v445
  %v458 = vrcp.pop %v446
  %v459 = vrcp.pop %v447
  %v460 = vrcp.pop %v448
  %v461 = vrcp.pop %v449
  %v462 = vrcp.pop %v450
  %v463 = vrcp.pop %v451
  %v464 = vrcp.pop %v452
  %v465 = vrcp.pop %v453
  %v466 = vrcp.pop %v454
  %467 = vst [vmem:[%s2] sm:$0xff] %v455
  %468 = vst [vmem:[%s2 + $0x8] sm:$0xff] %v456
  %469 = vst [vmem:[%s2 + $0x10] sm:$0xff] %v457
  %470 = vst [vmem:[%s2 + $0x18] sm:$0xff] %v458
  %471 = vst [vmem:[%s2 + $0x20] sm:$0xff] %v459
  %472 = vst [vmem:[%s2 + $0x28] sm:$0xff] %v460
  %473 = vst [vmem:[%s2 + $0x30] sm:$0xff] %v461
  %474 = vst [vmem:[%s2 + $0x38] sm:$0xff] %v462
  %475 = vst [vmem:[%s2 + $0x40] sm:$0xff] %v463
  %476 = vst [vmem:[%s2 + $0x48] sm:$0xff] %v464
  %477 = vst [vmem:[%s2 + $0x50] sm:$0xff] %v465
  %478 = vst [vmem:[%s2 + $0x58] sm:$0xff] %v466
  // Predicated region
  $region10: #{conv_generator_forward.7} parent=0 // pred_check
    _
  $region11: #{conv_generator_forward.7} parent=0 // pred_check_branch
    %480 = sbr.rel (0) target = $region13
  $region12: #{conv_generator_forward.7} parent=0 // pred_region
    _
  $region13: #{conv_generator_forward.7} parent=0 // pred_fallthru
    _
  // Predicated region
  $region14: #{conv_generator_forward.7} parent=0 // pred_check
    _
  $region15: #{conv_generator_forward.7} parent=0 // pred_check_branch
    %482 = sbr.rel (0) target = $region17
  $region16: #{conv_generator_forward.7} parent=0 // pred_region
    _
  $region17: #{conv_generator_forward.7} parent=0 // pred_fallthru
    _

</llo_original>
